<compile_context>
chip_gen: v7x
topology: tpu7x:2x2x1
jax: 0.10.0
libtpu: 0.0.40
codegen_flags: <defaults>
</compile_context>

<pallas_src>
import jax
import jax.numpy as jnp
from jax.experimental import pallas as pl
from jax.experimental.pallas import tpu as pltpu


HIDDEN_DIM = 300   # matches Critic(hidden_dim=300)
HIDDEN_PAD = 384   # 3 * 128 lanes; padded weights/biases are zero there


def _has_multiple_tensorcores():
    """True on chips with >1 TensorCore per chip (v7x); False on v5e/v6e."""
    try:
        kind = jax.devices()[0].device_kind.lower()
    except Exception:
        return False
    return ("v7" in kind) or ("7x" in kind)


def _critic_kernel(x_ref, g_ref, u_ref, w1x_ref, w1g_ref, w1u_ref,
                   b12_ref, w2_ref, w3_ref, b3_ref, q_ref):
    # x/g/u: (TB, d) f32. w1*/w2/w3: (hb, ., HP) bf16 (head-blocked).
    # b12: (hb, 2, HP) f32. b3: (2,) f32 in SMEM. q: (hb, TB, 1) f32.
    x = x_ref[...].astype(jnp.bfloat16)
    g = g_ref[...].astype(jnp.bfloat16)
    u = u_ref[...].astype(jnp.bfloat16)

    heads_per_block = w2_ref.shape[0]                 # 1 (split) or 2 (fused)
    head_base = pl.program_id(0) * heads_per_block
    for h in range(heads_per_block):                  # static unroll
        b = b12_ref[h]                                # (2, HP) f32
        # layer 1 (l1 / l4): concat(x,g,u) @ W1 expressed as three partial dots.
        a = (jnp.dot(x, w1x_ref[h], preferred_element_type=jnp.float32)
             + jnp.dot(g, w1g_ref[h], preferred_element_type=jnp.float32)
             + jnp.dot(u, w1u_ref[h], preferred_element_type=jnp.float32)
             + b[0:1, :])
        a = jnp.maximum(a, 0.0).astype(jnp.bfloat16)                  # (TB, HP)
        # layer 2 (l2 / l5)
        z = jnp.dot(a, w2_ref[h], preferred_element_type=jnp.float32) + b[1:2, :]
        z = jnp.maximum(z, 0.0).astype(jnp.bfloat16)                  # (TB, HP)
        # layer 3 (l3 / l6): scalar output bias comes from SMEM.
        q = jnp.dot(z, w3_ref[h], preferred_element_type=jnp.float32)  # (TB, 1)
        q_ref[h] = q + b3_ref[head_base + h]


def pack_params(params, state_dim, goal_dim, action_dim, hidden_pad=HIDDEN_PAD):
    """Head-stack, lane-pad (H -> HP multiple of 128) and bf16-cast the weights."""
    (w1, b1, w2, b2, w3, b3, w4, b4, w5, b5, w6, b6) = params
    in_dim, H = w1.shape
    assert in_dim == state_dim + goal_dim + action_dim
    HP = int(128 * pl.cdiv(max(hidden_pad, H), 128))

    pad_c = lambda a: jnp.pad(a, ((0, 0), (0, HP - a.shape[1])))
    pad_rc = lambda a: jnp.pad(a, ((0, HP - a.shape[0]), (0, HP - a.shape[1])))
    pad_r = lambda a: jnp.pad(a, ((0, HP - a.shape[0]), (0, 0)))

    s0, s1 = state_dim, state_dim + goal_dim
    w1p, w4p = pad_c(w1), pad_c(w4)                                   # (in_dim, HP)
    w1x = jnp.stack([w1p[:s0], w4p[:s0]]).astype(jnp.bfloat16)        # (2, sd, HP)
    w1g = jnp.stack([w1p[s0:s1], w4p[s0:s1]]).astype(jnp.bfloat16)    # (2, gd, HP)
    w1u = jnp.stack([w1p[s1:], w4p[s1:]]).astype(jnp.bfloat16)        # (2, ad, HP)
    b12 = jnp.stack([jnp.concatenate([pad_c(b1), pad_c(b2)], axis=0),
                     jnp.concatenate([pad_c(b4), pad_c(b5)], axis=0)]
                    ).astype(jnp.float32)                             # (2, 2, HP)
    w2h = jnp.stack([pad_rc(w2), pad_rc(w5)]).astype(jnp.bfloat16)    # (2, HP, HP)
    w3h = jnp.stack([pad_r(w3), pad_r(w6)]).astype(jnp.bfloat16)      # (2, HP, 1)
    b3h = jnp.concatenate([b3.reshape(-1), b6.reshape(-1)]).astype(jnp.float32)  # (2,)
    return (w1x, w1g, w1u, b12, w2h, w3h, b3h)


def manager_critic_forward(x, g, u, packed, *, split_heads=None, batch_tile=256):
    """Pallas implementation of ManagerCritic.forward -> (q1, q2), each (B, 1)."""
    w1x, w1g, w1u, b12, w2, w3, b3 = packed
    B, sd = x.shape
    gd, ad = g.shape[1], u.shape[1]
    HP = w2.shape[-1]

    if split_heads is None:
        split_heads = _has_multiple_tensorcores()
    n_head_blocks = 2 if split_heads else 1     # 2 only on v7x (2 TCs / chip)
    hb = 2 // n_head_blocks                     # heads handled per grid step

    tb = B if B <= batch_tile else batch_tile   # batch tile (weights amortized)
    nb = pl.cdiv(B, tb)

    bmap = lambda n, b: (b, 0)                  # batch-tiled activations
    wmap = lambda n, b: (n, 0, 0)               # head-blocked, batch-invariant weights

    in_specs = [
        pl.BlockSpec((tb, sd), bmap),
        pl.BlockSpec((tb, gd), bmap),
        pl.BlockSpec((tb, ad), bmap),
        pl.BlockSpec((hb, sd, HP), wmap),
        pl.BlockSpec((hb, gd, HP), wmap),
        pl.BlockSpec((hb, ad, HP), wmap),
        pl.BlockSpec((hb, 2, HP), wmap),
        pl.BlockSpec((hb, HP, HP), wmap),
        pl.BlockSpec((hb, HP, 1), wmap),
        pl.BlockSpec(memory_space=pltpu.MemorySpace.SMEM),   # b3: two scalars
    ]
    out_specs = pl.BlockSpec((hb, tb, 1), lambda n, b: (n, b, 0))
    out_shape = jax.ShapeDtypeStruct((2, B, 1), jnp.float32)

    inputs = (x, g, u, w1x, w1g, w1u, b12, w2, w3, b3)
    flops = 2 * 2 * B * ((sd + gd + ad) * HP + HP * HP + HP)
    bytes_accessed = int(sum(int(a.size) * a.dtype.itemsize for a in inputs)
                         + 2 * B * 4)

    q = pl.pallas_call(
        _critic_kernel,
        out_shape=out_shape,
        grid=(n_head_blocks, nb),
        in_specs=in_specs,
        out_specs=out_specs,
        compiler_params=pltpu.CompilerParams(
            dimension_semantics=("parallel", "parallel")),
        cost_estimate=pl.CostEstimate(flops=flops, transcendentals=0,
                                      bytes_accessed=bytes_accessed),
    )(*inputs)
    # TODO(synk): for repeated RL calls with frozen weights, persist the ~0.6 MB
    # of bf16 weights in VMEM across calls (cross-call prefetch) and/or ship
    # weight-only int8 on v5e/v6e (fp8 on v7x) to halve the dominant w2 DMA.
    return q[0], q[1]


def init_params(key, state_dim, goal_dim, action_dim, hidden_dim=HIDDEN_DIM):
    """Deterministic synthetic parameters ((in, out) layout; PyTorch-like init)."""
    in_dim = state_dim + goal_dim + action_dim
    dims = [
        (in_dim, hidden_dim),      # l1
        (hidden_dim, hidden_dim),  # l2
        (hidden_dim, 1),           # l3
        (in_dim, hidden_dim),      # l4
        (hidden_dim, hidden_dim),  # l5
        (hidden_dim, 1),           # l6
    ]
    params = []
    for (fan_in, fan_out) in dims:
        key, kw, kb = jax.random.split(key, 3)
        bound = 1.0 / jnp.sqrt(fan_in)
        w = jax.random.uniform(kw, (fan_in, fan_out), jnp.float32, -bound, bound)
        b = jax.random.uniform(kb, (1, fan_out), jnp.float32, -bound, bound)
        params += [w, b]
    return tuple(params)


def _reference_forward(x, g, u, params):
    """Plain-JAX reference mirroring the kernel's bf16-weight / f32-accumulate math."""
    (w1, b1, w2, b2, w3, b3, w4, b4, w5, b5, w6, b6) = params
    xu = jnp.concatenate([x, g, u], axis=1).astype(jnp.float32)

    def head(wa, ba, wb, bb, wc, bc):
        h = jnp.dot(xu.astype(jnp.bfloat16), wa.astype(jnp.bfloat16),
                    preferred_element_type=jnp.float32) + ba
        h = jnp.maximum(h, 0.0).astype(jnp.bfloat16)
        z = jnp.dot(h, wb.astype(jnp.bfloat16),
                    preferred_element_type=jnp.float32) + bb
        z = jnp.maximum(z, 0.0).astype(jnp.bfloat16)
        return jnp.dot(z, wc.astype(jnp.bfloat16),
                       preferred_element_type=jnp.float32) + bc

    return head(w1, b1, w2, b2, w3, b3), head(w4, b4, w5, b5, w6, b6)


if __name__ == "__main__":
    state_dim, goal_dim, action_dim = 10, 5, 5
    batch = 8  # sublane-aligned batch

    key = jax.random.PRNGKey(0)
    key, kx, kg, ku, kp = jax.random.split(key, 5)
    x = jax.random.normal(kx, (batch, state_dim), jnp.float32)
    g = jax.random.normal(kg, (batch, goal_dim), jnp.float32)
    u = jax.random.normal(ku, (batch, action_dim), jnp.float32)

    params = init_params(kp, state_dim, goal_dim, action_dim)
    packed = pack_params(params, state_dim, goal_dim, action_dim)

    fwd = jax.jit(manager_critic_forward)
    q1, q2 = fwd(x, g, u, packed)
    jax.block_until_ready((q1, q2))

    q1_ref, q2_ref = _reference_forward(x, g, u, params)
    assert q1.shape == (batch, 1) and q2.shape == (batch, 1)
    assert jnp.allclose(q1, q1_ref, atol=1e-2, rtol=1e-2)
    assert jnp.allclose(q2, q2_ref, atol=1e-2, rtol=1e-2)

    print("KERNEL_OK")
</pallas_src>

<mosaic_0001>
module attributes {stable_mosaic.version = 11 : i64} {
  func.func @_critic_kernel(%arg0: i32, %arg1: i32, %arg2: memref<8x10xf32, #tpu.memory_space<vmem>>, %arg3: memref<8x5xf32, #tpu.memory_space<vmem>>, %arg4: memref<8x5xf32, #tpu.memory_space<vmem>>, %arg5: memref<2x10x384xbf16, #tpu.memory_space<vmem>>, %arg6: memref<2x5x384xbf16, #tpu.memory_space<vmem>>, %arg7: memref<2x5x384xbf16, #tpu.memory_space<vmem>>, %arg8: memref<2x2x384xf32, #tpu.memory_space<vmem>>, %arg9: memref<2x384x384xbf16, #tpu.memory_space<vmem>>, %arg10: memref<2x384x1xbf16, #tpu.memory_space<vmem>>, %arg11: memref<2xf32, #tpu.memory_space<smem>>, %arg12: memref<2x8x1xf32, #tpu.memory_space<vmem>>) attributes {dimension_semantics = [#tpu.dimension_semantics<parallel>, #tpu.dimension_semantics<parallel>], iteration_bounds = array<i64: 1, 1>, scalar_prefetch = 0 : i64, scratch_operands = 0 : i64, tpu.core_type = #tpu.core_type<tc>, window_params = [{transform_indices = @transform_0, window_bounds = array<i64: 8, 10>}, {transform_indices = @transform_1, window_bounds = array<i64: 8, 5>}, {transform_indices = @transform_2, window_bounds = array<i64: 8, 5>}, {transform_indices = @transform_3, window_bounds = array<i64: 2, 10, 384>}, {transform_indices = @transform_4, window_bounds = array<i64: 2, 5, 384>}, {transform_indices = @transform_5, window_bounds = array<i64: 2, 5, 384>}, {transform_indices = @transform_6, window_bounds = array<i64: 2, 2, 384>}, {transform_indices = @transform_7, window_bounds = array<i64: 2, 384, 384>}, {transform_indices = @transform_8, window_bounds = array<i64: 2, 384, 1>}, {transform_indices = @transform_9, window_bounds = array<i64: 2>}, {transform_indices = @transform_10, window_bounds = array<i64: 2, 8, 1>}]} {
    %c0 = arith.constant 0 : index
    %c0_0 = arith.constant 0 : index
    %0 = vector.load %arg2[%c0, %c0_0] : memref<8x10xf32, #tpu.memory_space<vmem>>, vector<8x10xf32>
    %1 = arith.truncf %0 : vector<8x10xf32> to vector<8x10xbf16>
    %c0_1 = arith.constant 0 : index
    %c0_2 = arith.constant 0 : index
    %2 = vector.load %arg3[%c0_1, %c0_2] : memref<8x5xf32, #tpu.memory_space<vmem>>, vector<8x5xf32>
    %3 = arith.truncf %2 : vector<8x5xf32> to vector<8x5xbf16>
    %c0_3 = arith.constant 0 : index
    %c0_4 = arith.constant 0 : index
    %4 = vector.load %arg4[%c0_3, %c0_4] : memref<8x5xf32, #tpu.memory_space<vmem>>, vector<8x5xf32>
    %5 = arith.truncf %4 : vector<8x5xf32> to vector<8x5xbf16>
    %c2_i32 = arith.constant 2 : i32
    %6 = arith.muli %arg0, %c2_i32 : i32
    %c0_5 = arith.constant 0 : index
    %c0_6 = arith.constant 0 : index
    %c0_7 = arith.constant 0 : index
    %7 = vector.load %arg8[%c0_5, %c0_6, %c0_7] : memref<2x2x384xf32, #tpu.memory_space<vmem>>, vector<1x2x384xf32>
    %8 = vector.shape_cast %7 : vector<1x2x384xf32> to vector<2x384xf32>
    %c0_8 = arith.constant 0 : index
    %c0_9 = arith.constant 0 : index
    %c0_10 = arith.constant 0 : index
    %9 = vector.load %arg5[%c0_8, %c0_9, %c0_10] : memref<2x10x384xbf16, #tpu.memory_space<vmem>>, vector<1x10x384xbf16>
    %10 = vector.shape_cast %9 : vector<1x10x384xbf16> to vector<10x384xbf16>
    %cst = arith.constant dense<0.000000e+00> : vector<8x384xf32>
    %11 = tpu.matmul %1, %10, %cst {dimension_numbers = #tpu.dot_dimension_numbers<[1], [0], [0], [1], [0, 0, 1, 1], [], []>} : vector<8x10xbf16>, vector<10x384xbf16>, vector<8x384xf32> -> vector<8x384xf32>
    %c0_11 = arith.constant 0 : index
    %c0_12 = arith.constant 0 : index
    %c0_13 = arith.constant 0 : index
    %12 = vector.load %arg6[%c0_11, %c0_12, %c0_13] : memref<2x5x384xbf16, #tpu.memory_space<vmem>>, vector<1x5x384xbf16>
    %13 = vector.shape_cast %12 : vector<1x5x384xbf16> to vector<5x384xbf16>
    %cst_14 = arith.constant dense<0.000000e+00> : vector<8x384xf32>
    %14 = tpu.matmul %3, %13, %cst_14 {dimension_numbers = #tpu.dot_dimension_numbers<[1], [0], [0], [1], [0, 0, 1, 1], [], []>} : vector<8x5xbf16>, vector<5x384xbf16>, vector<8x384xf32> -> vector<8x384xf32>
    %15 = arith.addf %11, %14 : vector<8x384xf32>
    %c0_15 = arith.constant 0 : index
    %c0_16 = arith.constant 0 : index
    %c0_17 = arith.constant 0 : index
    %16 = vector.load %arg7[%c0_15, %c0_16, %c0_17] : memref<2x5x384xbf16, #tpu.memory_space<vmem>>, vector<1x5x384xbf16>
    %17 = vector.shape_cast %16 : vector<1x5x384xbf16> to vector<5x384xbf16>
    %cst_18 = arith.constant dense<0.000000e+00> : vector<8x384xf32>
    %18 = tpu.matmul %5, %17, %cst_18 {dimension_numbers = #tpu.dot_dimension_numbers<[1], [0], [0], [1], [0, 0, 1, 1], [], []>} : vector<8x5xbf16>, vector<5x384xbf16>, vector<8x384xf32> -> vector<8x384xf32>
    %19 = arith.addf %15, %18 : vector<8x384xf32>
    %20 = vector.extract_strided_slice %8 {offsets = [0, 0], sizes = [1, 384], strides = [1, 1]} : vector<2x384xf32> to vector<1x384xf32>
    %21 = vector.broadcast %20 : vector<1x384xf32> to vector<8x384xf32>
    %22 = arith.addf %19, %21 : vector<8x384xf32>
    %cst_19 = arith.constant 0.000000e+00 : f32
    %23 = vector.broadcast %cst_19 : f32 to vector<8x384xf32>
    %24 = arith.maximumf %22, %23 : vector<8x384xf32>
    %25 = arith.truncf %24 : vector<8x384xf32> to vector<8x384xbf16>
    %c0_20 = arith.constant 0 : index
    %c0_21 = arith.constant 0 : index
    %c0_22 = arith.constant 0 : index
    %26 = vector.load %arg9[%c0_20, %c0_21, %c0_22] : memref<2x384x384xbf16, #tpu.memory_space<vmem>>, vector<1x384x384xbf16>
    %27 = vector.shape_cast %26 : vector<1x384x384xbf16> to vector<384x384xbf16>
    %cst_23 = arith.constant dense<0.000000e+00> : vector<8x384xf32>
    %28 = tpu.matmul %25, %27, %cst_23 {dimension_numbers = #tpu.dot_dimension_numbers<[1], [0], [0], [1], [0, 0, 1, 1], [], []>} : vector<8x384xbf16>, vector<384x384xbf16>, vector<8x384xf32> -> vector<8x384xf32>
    %29 = vector.extract_strided_slice %8 {offsets = [1, 0], sizes = [1, 384], strides = [1, 1]} : vector<2x384xf32> to vector<1x384xf32>
    %30 = vector.broadcast %29 : vector<1x384xf32> to vector<8x384xf32>
    %31 = arith.addf %28, %30 : vector<8x384xf32>
    %cst_24 = arith.constant 0.000000e+00 : f32
    %32 = vector.broadcast %cst_24 : f32 to vector<8x384xf32>
    %33 = arith.maximumf %31, %32 : vector<8x384xf32>
    %34 = arith.truncf %33 : vector<8x384xf32> to vector<8x384xbf16>
    %c0_25 = arith.constant 0 : index
    %c0_26 = arith.constant 0 : index
    %c0_27 = arith.constant 0 : index
    %35 = vector.load %arg10[%c0_25, %c0_26, %c0_27] : memref<2x384x1xbf16, #tpu.memory_space<vmem>>, vector<1x384x1xbf16>
    %36 = vector.shape_cast %35 : vector<1x384x1xbf16> to vector<384x1xbf16>
    %cst_28 = arith.constant dense<0.000000e+00> : vector<8x1xf32>
    %37 = tpu.matmul %34, %36, %cst_28 {dimension_numbers = #tpu.dot_dimension_numbers<[1], [0], [0], [1], [0, 0, 1, 1], [], []>} : vector<8x384xbf16>, vector<384x1xbf16>, vector<8x1xf32> -> vector<8x1xf32>
    %c0_i32 = arith.constant 0 : i32
    %38 = arith.addi %6, %c0_i32 : i32
    %39 = arith.index_cast %38 : i32 to index
    %40 = memref.load %arg11[%39] : memref<2xf32, #tpu.memory_space<smem>>
    %41 = vector.broadcast %40 : f32 to vector<8x1xf32>
    %42 = arith.addf %37, %41 : vector<8x1xf32>
    %c0_29 = arith.constant 0 : index
    %c0_30 = arith.constant 0 : index
    %c0_31 = arith.constant 0 : index
    %43 = vector.load %arg12[%c0_29, %c0_30, %c0_31] : memref<2x8x1xf32, #tpu.memory_space<vmem>>, vector<1x8x1xf32>
    %44 = vector.shape_cast %43 : vector<1x8x1xf32> to vector<8x1xf32>
    %45 = vector.shape_cast %42 : vector<8x1xf32> to vector<1x8x1xf32>
    tpu.vector_store %arg12[%c0_29, %c0_30, %c0_31], %45 {strides = array<i32>} : memref<2x8x1xf32, #tpu.memory_space<vmem>>, vector<1x8x1xf32>,
    %c1 = arith.constant 1 : index
    %c0_32 = arith.constant 0 : index
    %c0_33 = arith.constant 0 : index
    %46 = vector.load %arg8[%c1, %c0_32, %c0_33] : memref<2x2x384xf32, #tpu.memory_space<vmem>>, vector<1x2x384xf32>
    %47 = vector.shape_cast %46 : vector<1x2x384xf32> to vector<2x384xf32>
    %c1_34 = arith.constant 1 : index
    %c0_35 = arith.constant 0 : index
    %c0_36 = arith.constant 0 : index
    %48 = vector.load %arg5[%c1_34, %c0_35, %c0_36] : memref<2x10x384xbf16, #tpu.memory_space<vmem>>, vector<1x10x384xbf16>
    %49 = vector.shape_cast %48 : vector<1x10x384xbf16> to vector<10x384xbf16>
    %cst_37 = arith.constant dense<0.000000e+00> : vector<8x384xf32>
    %50 = tpu.matmul %1, %49, %cst_37 {dimension_numbers = #tpu.dot_dimension_numbers<[1], [0], [0], [1], [0, 0, 1, 1], [], []>} : vector<8x10xbf16>, vector<10x384xbf16>, vector<8x384xf32> -> vector<8x384xf32>
    %c1_38 = arith.constant 1 : index
    %c0_39 = arith.constant 0 : index
    %c0_40 = arith.constant 0 : index
    %51 = vector.load %arg6[%c1_38, %c0_39, %c0_40] : memref<2x5x384xbf16, #tpu.memory_space<vmem>>, vector<1x5x384xbf16>
    %52 = vector.shape_cast %51 : vector<1x5x384xbf16> to vector<5x384xbf16>
    %cst_41 = arith.constant dense<0.000000e+00> : vector<8x384xf32>
    %53 = tpu.matmul %3, %52, %cst_41 {dimension_numbers = #tpu.dot_dimension_numbers<[1], [0], [0], [1], [0, 0, 1, 1], [], []>} : vector<8x5xbf16>, vector<5x384xbf16>, vector<8x384xf32> -> vector<8x384xf32>
    %54 = arith.addf %50, %53 : vector<8x384xf32>
    %c1_42 = arith.constant 1 : index
    %c0_43 = arith.constant 0 : index
    %c0_44 = arith.constant 0 : index
    %55 = vector.load %arg7[%c1_42, %c0_43, %c0_44] : memref<2x5x384xbf16, #tpu.memory_space<vmem>>, vector<1x5x384xbf16>
    %56 = vector.shape_cast %55 : vector<1x5x384xbf16> to vector<5x384xbf16>
    %cst_45 = arith.constant dense<0.000000e+00> : vector<8x384xf32>
    %57 = tpu.matmul %5, %56, %cst_45 {dimension_numbers = #tpu.dot_dimension_numbers<[1], [0], [0], [1], [0, 0, 1, 1], [], []>} : vector<8x5xbf16>, vector<5x384xbf16>, vector<8x384xf32> -> vector<8x384xf32>
    %58 = arith.addf %54, %57 : vector<8x384xf32>
    %59 = vector.extract_strided_slice %47 {offsets = [0, 0], sizes = [1, 384], strides = [1, 1]} : vector<2x384xf32> to vector<1x384xf32>
    %60 = vector.broadcast %59 : vector<1x384xf32> to vector<8x384xf32>
    %61 = arith.addf %58, %60 : vector<8x384xf32>
    %cst_46 = arith.constant 0.000000e+00 : f32
    %62 = vector.broadcast %cst_46 : f32 to vector<8x384xf32>
    %63 = arith.maximumf %61, %62 : vector<8x384xf32>
    %64 = arith.truncf %63 : vector<8x384xf32> to vector<8x384xbf16>
    %c1_47 = arith.constant 1 : index
    %c0_48 = arith.constant 0 : index
    %c0_49 = arith.constant 0 : index
    %65 = vector.load %arg9[%c1_47, %c0_48, %c0_49] : memref<2x384x384xbf16, #tpu.memory_space<vmem>>, vector<1x384x384xbf16>
    %66 = vector.shape_cast %65 : vector<1x384x384xbf16> to vector<384x384xbf16>
    %cst_50 = arith.constant dense<0.000000e+00> : vector<8x384xf32>
    %67 = tpu.matmul %64, %66, %cst_50 {dimension_numbers = #tpu.dot_dimension_numbers<[1], [0], [0], [1], [0, 0, 1, 1], [], []>} : vector<8x384xbf16>, vector<384x384xbf16>, vector<8x384xf32> -> vector<8x384xf32>
    %68 = vector.extract_strided_slice %47 {offsets = [1, 0], sizes = [1, 384], strides = [1, 1]} : vector<2x384xf32> to vector<1x384xf32>
    %69 = vector.broadcast %68 : vector<1x384xf32> to vector<8x384xf32>
    %70 = arith.addf %67, %69 : vector<8x384xf32>
    %cst_51 = arith.constant 0.000000e+00 : f32
    %71 = vector.broadcast %cst_51 : f32 to vector<8x384xf32>
    %72 = arith.maximumf %70, %71 : vector<8x384xf32>
    %73 = arith.truncf %72 : vector<8x384xf32> to vector<8x384xbf16>
    %c1_52 = arith.constant 1 : index
    %c0_53 = arith.constant 0 : index
    %c0_54 = arith.constant 0 : index
    %74 = vector.load %arg10[%c1_52, %c0_53, %c0_54] : memref<2x384x1xbf16, #tpu.memory_space<vmem>>, vector<1x384x1xbf16>
    %75 = vector.shape_cast %74 : vector<1x384x1xbf16> to vector<384x1xbf16>
    %cst_55 = arith.constant dense<0.000000e+00> : vector<8x1xf32>
    %76 = tpu.matmul %73, %75, %cst_55 {dimension_numbers = #tpu.dot_dimension_numbers<[1], [0], [0], [1], [0, 0, 1, 1], [], []>} : vector<8x384xbf16>, vector<384x1xbf16>, vector<8x1xf32> -> vector<8x1xf32>
    %c1_i32 = arith.constant 1 : i32
    %77 = arith.addi %6, %c1_i32 : i32
    %78 = arith.index_cast %77 : i32 to index
    %79 = memref.load %arg11[%78] : memref<2xf32, #tpu.memory_space<smem>>
    %80 = vector.broadcast %79 : f32 to vector<8x1xf32>
    %81 = arith.addf %76, %80 : vector<8x1xf32>
    %c1_56 = arith.constant 1 : index
    %c0_57 = arith.constant 0 : index
    %c0_58 = arith.constant 0 : index
    %82 = vector.load %arg12[%c1_56, %c0_57, %c0_58] : memref<2x8x1xf32, #tpu.memory_space<vmem>>, vector<1x8x1xf32>
    %83 = vector.shape_cast %82 : vector<1x8x1xf32> to vector<8x1xf32>
    %84 = vector.shape_cast %81 : vector<8x1xf32> to vector<1x8x1xf32>
    tpu.vector_store %arg12[%c1_56, %c0_57, %c0_58], %84 {strides = array<i32>} : memref<2x8x1xf32, #tpu.memory_space<vmem>>, vector<1x8x1xf32>,
    return
  }
  func.func @transform_0(%arg0: i32, %arg1: i32) -> (i32, i32) {
    %c0_i32 = arith.constant 0 : i32
    %c0_i32_0 = arith.constant 0 : i32
    return %arg1, %c0_i32 : i32, i32
  }
  func.func @transform_1(%arg0: i32, %arg1: i32) -> (i32, i32) {
    %c0_i32 = arith.constant 0 : i32
    %c0_i32_0 = arith.constant 0 : i32
    return %arg1, %c0_i32 : i32, i32
  }
  func.func @transform_2(%arg0: i32, %arg1: i32) -> (i32, i32) {
    %c0_i32 = arith.constant 0 : i32
    %c0_i32_0 = arith.constant 0 : i32
    return %arg1, %c0_i32 : i32, i32
  }
  func.func @transform_3(%arg0: i32, %arg1: i32) -> (i32, i32, i32) {
    %c0_i32 = arith.constant 0 : i32
    %c0_i32_0 = arith.constant 0 : i32
    %c0_i32_1 = arith.constant 0 : i32
    return %arg0, %c0_i32, %c0_i32_0 : i32, i32, i32
  }
  func.func @transform_4(%arg0: i32, %arg1: i32) -> (i32, i32, i32) {
    %c0_i32 = arith.constant 0 : i32
    %c0_i32_0 = arith.constant 0 : i32
    %c0_i32_1 = arith.constant 0 : i32
    return %arg0, %c0_i32, %c0_i32_0 : i32, i32, i32
  }
  func.func @transform_5(%arg0: i32, %arg1: i32) -> (i32, i32, i32) {
    %c0_i32 = arith.constant 0 : i32
    %c0_i32_0 = arith.constant 0 : i32
    %c0_i32_1 = arith.constant 0 : i32
    return %arg0, %c0_i32, %c0_i32_0 : i32, i32, i32
  }
  func.func @transform_6(%arg0: i32, %arg1: i32) -> (i32, i32, i32) {
    %c0_i32 = arith.constant 0 : i32
    %c0_i32_0 = arith.constant 0 : i32
    %c0_i32_1 = arith.constant 0 : i32
    return %arg0, %c0_i32, %c0_i32_0 : i32, i32, i32
  }
  func.func @transform_7(%arg0: i32, %arg1: i32) -> (i32, i32, i32) {
    %c0_i32 = arith.constant 0 : i32
    %c0_i32_0 = arith.constant 0 : i32
    %c0_i32_1 = arith.constant 0 : i32
    return %arg0, %c0_i32, %c0_i32_0 : i32, i32, i32
  }
  func.func @transform_8(%arg0: i32, %arg1: i32) -> (i32, i32, i32) {
    %c0_i32 = arith.constant 0 : i32
    %c0_i32_0 = arith.constant 0 : i32
    %c0_i32_1 = arith.constant 0 : i32
    return %arg0, %c0_i32, %c0_i32_0 : i32, i32, i32
  }
  func.func @transform_9(%arg0: i32, %arg1: i32) -> i32 {
    %c0_i32 = arith.constant 0 : i32
    %c0_i32_0 = arith.constant 0 : i32
    return %c0_i32 : i32
  }
  func.func @transform_10(%arg0: i32, %arg1: i32) -> (i32, i32, i32) {
    %c0_i32 = arith.constant 0 : i32
    %c0_i32_0 = arith.constant 0 : i32
    return %arg0, %arg1, %c0_i32 : i32, i32, i32
  }
}

</mosaic_0001>

<llo_original>
// kernel: manager_critic_forward.1
$region0: #{manager_critic_forward.1}
  #allocation0 [shape = 'u32[]', space=smem, size = 0x4, offset = 0x4, fixed_abs, tag = 'smem constant byte address 0x4 - core index']
  #allocation1 [shape = 'u32[144,128]{1,0:T(1,128)}', space=vmem, size = 0x12000, scoped, tag = 'internal scratch']
  %s0 = inlined_call_operand.vmem [shape: f32[8,10], index: 0, kind: input, shape index: {}]
  %s1 = inlined_call_operand.vmem [shape: f32[8,5], index: 1, kind: input, shape index: {}]
  %s2 = inlined_call_operand.vmem [shape: f32[8,5], index: 2, kind: input, shape index: {}]
  %s3 = inlined_call_operand.vmem [shape: bf16[2,10,384], index: 3, kind: input, shape index: {}]
  %s4 = inlined_call_operand.vmem [shape: bf16[2,5,384], index: 4, kind: input, shape index: {}]
  %s5 = inlined_call_operand.vmem [shape: bf16[2,5,384], index: 5, kind: input, shape index: {}]
  %s6 = inlined_call_operand.vmem [shape: f32[2,2,384], index: 6, kind: input, shape index: {}]
  %s7 = inlined_call_operand.hbm [shape: bf16[2,384,384], index: 7, kind: input, shape index: {}]
  %s8 = inlined_call_operand.vmem [shape: bf16[2,384,1], index: 8, kind: input, shape index: {}]
  %s9 = inlined_call_operand.vmem [shape: f32[2], index: 9, kind: input, shape index: {}]
  %s10 = inlined_call_operand.vmem [shape: f32[2,8,1], index: 10, kind: output, shape index: {}]
  %s11 = sld [smem:[#allocation0]]
  $region58: #{manager_critic_forward.1} parent=0
    _
  %s13 = ssub.s32 1, %s11
  %s14 = scalar_select 0, %s13, %s11
  $region1: #{manager_critic_forward.1} parent=0
    #allocation2 [shape = 'u8[589824]{0}', space=vmem, size = 0x90000, scoped, tag = 'input window, operand 7, single buffered']
    #allocation3 [shape = 's32[1]{0}', space=sflag, size = 0x4, scoped, tag = 'scoped memory for manager_critic_forward.1']
    #allocation4 [shape = 's32[1]{0}', space=sflag, size = 0x4, scoped, tag = 'scoped memory for manager_critic_forward.1']
    #allocation5 [shape = 'u8[512]{0}', space=smem, size = 0x200, scoped, tag = 'input window, operand 9, single buffered']
    %15 = vsyncpa [#allocation3], 0
    %16 = vsyncpa [#allocation4], 0
    // Predicated region
    $region2: #{manager_critic_forward.1} parent=1 // pred_check
      _
    $region3: #{manager_critic_forward.1} parent=1 // pred_check_branch
      %18 = sbr.rel (0) target = $region5
    $region4: #{manager_critic_forward.1} parent=1 // pred_region
      _
    $region5: #{manager_critic_forward.1} parent=1 // pred_fallthru
      _
    // Predicated region
    $region6: #{manager_critic_forward.1} parent=1 // pred_check
      _
    $region7: #{manager_critic_forward.1} parent=1 // pred_check_branch
      %20 = sbr.rel (0) target = $region9
    $region8: #{manager_critic_forward.1} parent=1 // pred_region
      _
    $region9: #{manager_critic_forward.1} parent=1 // pred_fallthru
      _
    // Predicated region
    $region10: #{manager_critic_forward.1} parent=1 // pred_check
      _
    $region11: #{manager_critic_forward.1} parent=1 // pred_check_branch
      %22 = sbr.rel (0) target = $region13
    $region12: #{manager_critic_forward.1} parent=1 // pred_region
      _
    $region13: #{manager_critic_forward.1} parent=1 // pred_fallthru
      _
    // Predicated region
    $region14: #{manager_critic_forward.1} parent=1 // pred_check
      _
    $region15: #{manager_critic_forward.1} parent=1 // pred_check_branch
      %24 = sbr.rel (0) target = $region17
    $region16: #{manager_critic_forward.1} parent=1 // pred_region
      _
    $region17: #{manager_critic_forward.1} parent=1 // pred_fallthru
      _
    // Predicated region
    $region18: #{manager_critic_forward.1} parent=1 // pred_check
      _
    $region19: #{manager_critic_forward.1} parent=1 // pred_check_branch
      %26 = sbr.rel (0) target = $region21
    $region20: #{manager_critic_forward.1} parent=1 // pred_region
      _
    $region21: #{manager_critic_forward.1} parent=1 // pred_fallthru
      _
    // Predicated region
    $region22: #{manager_critic_forward.1} parent=1 // pred_check
      _
    $region23: #{manager_critic_forward.1} parent=1 // pred_check_branch
      %28 = sbr.rel (0) target = $region25
    $region24: #{manager_critic_forward.1} parent=1 // pred_region
      _
    $region25: #{manager_critic_forward.1} parent=1 // pred_fallthru
      _
    // Predicated region
    $region26: #{manager_critic_forward.1} parent=1 // pred_check
      _
    $region27: #{manager_critic_forward.1} parent=1 // pred_check_branch
      %30 = sbr.rel (0) target = $region29
    $region28: #{manager_critic_forward.1} parent=1 // pred_region
      _
    $region29: #{manager_critic_forward.1} parent=1 // pred_fallthru
      _
    // Predicated region
    $region30: #{manager_critic_forward.1} parent=1 // pred_check
      _
    $region31: #{manager_critic_forward.1} parent=1 // pred_check_branch
      %32 = sbr.rel (0) target = $region33
    $region32: #{manager_critic_forward.1} parent=1 // pred_region
      %s34 = ssub.s32 18432, 18432
      %35 = vsyncadd [#allocation3], %s34
      %s36 = sshll.u32 [#allocation2], 4
      %s37 = int_to_ptr.vmem [resolvable:$true] %s36
      %42 = dma.hbm_to_vmem [thread:$0]  %s7, 18432, %s37, [#allocation3], 192, 192, 12
    $region33: #{manager_critic_forward.1} parent=1 // pred_fallthru
      _
    // Predicated region
    $region34: #{manager_critic_forward.1} parent=1 // pred_check
      _
    $region35: #{manager_critic_forward.1} parent=1 // pred_check_branch
      %44 = sbr.rel (0) target = $region37
    $region36: #{manager_critic_forward.1} parent=1 // pred_region
      _
    $region37: #{manager_critic_forward.1} parent=1 // pred_fallthru
      _
    // Predicated region
    $region38: #{manager_critic_forward.1} parent=1 // pred_check
      _
    $region39: #{manager_critic_forward.1} parent=1 // pred_check_branch
      %46 = sbr.rel (0) target = $region41
    $region40: #{manager_critic_forward.1} parent=1 // pred_region
      %s48 = ssub.s32 16, 16
      %49 = vsyncadd [#allocation4], %s48
      %s51 = sshll.u32 %s9, 4
      %s52 = int_to_ptr.vmem [resolvable:$true] %s51
      %54 = dma.vmem_to_smem %s52, 16, [#allocation5], [#allocation4]
    $region41: #{manager_critic_forward.1} parent=1 // pred_fallthru
      _
    // Predicated region
    $region42: #{manager_critic_forward.1} parent=1 // pred_check
      _
    $region43: #{manager_critic_forward.1} parent=1 // pred_check_branch
      %56 = sbr.rel (0) target = $region45
    $region44: #{manager_critic_forward.1} parent=1 // pred_region
      %57 = dma.done [#allocation3], 18432
    $region45: #{manager_critic_forward.1} parent=1 // pred_fallthru
      _
    // Predicated region
    $region46: #{manager_critic_forward.1} parent=1 // pred_check
      _
    $region47: #{manager_critic_forward.1} parent=1 // pred_check_branch
      %59 = sbr.rel (0) target = $region49
    $region48: #{manager_critic_forward.1} parent=1 // pred_region
      %60 = dma.done [#allocation4], 16
    $region49: #{manager_critic_forward.1} parent=1 // pred_fallthru
      _
    %61 = sfence
    %v63 = vld [vmem:[%s0] sm:$0xff]
    %v64 = vpack.c.bf16 %v63, %v63
    %v65 = vld [vmem:[%s1] sm:$0xff]
    %v66 = vpack.c.bf16 %v65, %v65
    %v67 = vld [vmem:[%s2] sm:$0xff]
    %v68 = vpack.c.bf16 %v67, %v67
    %s69 = smul.u32 0, 2
    %v70 = vld [vmem:[%s6] sm:$0x3f]
    %v71 = vld [vmem:[%s3] sm:$0xff]
    %v72 = vld [vmem:[%s3 + $0x8] sm:$0xf]
    %v73 = vld [vmem:[%s3 + $0xc] sm:$0x11]
    %v74 = vld [vmem:[%s3 + $0x14] sm:$0x1]
    %v75 = vld [vmem:[%s4] sm:$0x77]
    %v76 = vld [vmem:[%s4 + $0x8] sm:$0x7]
    %v79 = vunpack.c.l.b16 %v75
    %v80 = vunpack.c.h.b16 %v75
    %v81 = vunpack.c.l.b16 %v76
    %v82 = vpack.c.b16 %v79, %v79
    %v83 = vpack.c.b16 %v80, %v80
    %v84 = vpack.c.b16 %v81, %v81
    %vm85 = vcmask 39936
    %v87 = vsel %vm85, %v66, 0
    %vm89 = vcmask 1041408
    %vm90 = vcmask 1042432
    %v91 = vsel %vm89, 4294967295, 65535
    %v92 = vsel %vm90, %v91, 0
    %v94 = vand.u32 %v82, %v92
    %v97 = vand.u32 %v83, %v92
    %v100 = vand.u32 %v84, %v92
    %102 = vmatprep.subr.bf16.mxu0 %v97
    %103 = vmatpush1.bf16.msra.mxu0 %v94
    %104 = vmatprep.subr.bf16.mxu0 0
    %105 = vmatpush1.bf16.msra.mxu0 0
    %106 = vmatprep.subr.bf16.mxu0 0
    %107 = vmatpush1.bf16.msra.mxu0 0
    %108 = vmatprep.subr.bf16.mxu0 0
    %109 = vmatpush1.bf16.msra.mxu0 0
    %110 = vmatprep.subr.bf16.mxu0 0
    %111 = vmatpush1.bf16.msra.mxu0 0
    %112 = vmatprep.subr.bf16.mxu0 0
    %113 = vmatpush1.bf16.msra.mxu0 0
    %114 = vmatprep.subr.bf16.mxu0 0
    %115 = vmatpush1.bf16.msra.mxu0 0
    %116 = vmatprep.subr.bf16.mxu0 0
    %117 = vmatpush1.bf16.msra.mxu0 0
    %118 = vmatprep.subr.bf16.mxu0 0
    %119 = vmatpush1.bf16.msra.mxu0 0
    %120 = vmatprep.subr.bf16.mxu0 0
    %121 = vmatpush1.bf16.msra.mxu0 0
    %122 = vmatprep.subr.bf16.mxu0 0
    %123 = vmatpush1.bf16.msra.mxu0 0
    %124 = vmatprep.subr.bf16.mxu0 0
    %125 = vmatpush1.bf16.msra.mxu0 0
    %126 = vmatprep.subr.bf16.mxu0 0
    %127 = vmatpush1.bf16.msra.mxu0 0
    %128 = vmatprep.subr.bf16.mxu0 0
    %129 = vmatpush1.bf16.msra.mxu0 0
    %130 = vmatprep.subr.bf16.mxu0 0
    %131 = vmatpush1.bf16.msra.mxu0 0
    %132 = vmatprep.subr.bf16.mxu0 0
    %133 = vmatpush1.bf16.msra.mxu0 0
    %134 = vmatprep.mubr.bf16.mxu0 0
    %135 = vmatmul.mubr.bf16.gmra.mrb[0].mxu0 %v87
    %v136 = vpop.f32.mrb[0].mxu0
    %v137 = vadd.f32 0.0, %v136
    %v138 = vpop.f32.mrb[0].mxu0
    %v139 = vadd.f32 0.0, %v138
    %v140 = vpop.f32.mrb[0].mxu0
    %v141 = vpop.f32.mrb[0].mxu0
    %142 = vdwg.mxu0
    %143 = vmatprep.subr.bf16.mxu0 0
    %144 = vmatpush1.bf16.msra.mxu0 %v100
    %145 = vmatprep.subr.bf16.mxu0 0
    %146 = vmatpush1.bf16.msra.mxu0 0
    %147 = vmatprep.subr.bf16.mxu0 0
    %148 = vmatpush1.bf16.msra.mxu0 0
    %149 = vmatprep.subr.bf16.mxu0 0
    %150 = vmatpush1.bf16.msra.mxu0 0
    %151 = vmatprep.subr.bf16.mxu0 0
    %152 = vmatpush1.bf16.msra.mxu0 0
    %153 = vmatprep.subr.bf16.mxu0 0
    %154 = vmatpush1.bf16.msra.mxu0 0
    %155 = vmatprep.subr.bf16.mxu0 0
    %156 = vmatpush1.bf16.msra.mxu0 0
    %157 = vmatprep.subr.bf16.mxu0 0
    %158 = vmatpush1.bf16.msra.mxu0 0
    %159 = vmatprep.subr.bf16.mxu0 0
    %160 = vmatpush1.bf16.msra.mxu0 0
    %161 = vmatprep.subr.bf16.mxu0 0
    %162 = vmatpush1.bf16.msra.mxu0 0
    %163 = vmatprep.subr.bf16.mxu0 0
    %164 = vmatpush1.bf16.msra.mxu0 0
    %165 = vmatprep.subr.bf16.mxu0 0
    %166 = vmatpush1.bf16.msra.mxu0 0
    %167 = vmatprep.subr.bf16.mxu0 0
    %168 = vmatpush1.bf16.msra.mxu0 0
    %169 = vmatprep.subr.bf16.mxu0 0
    %170 = vmatpush1.bf16.msra.mxu0 0
    %171 = vmatprep.subr.bf16.mxu0 0
    %172 = vmatpush1.bf16.msra.mxu0 0
    %173 = vmatprep.subr.bf16.mxu0 0
    %174 = vmatpush1.bf16.msra.mxu0 0
    %175 = vmatprep.mubr.bf16.mxu0 0
    %176 = vmatmul.mubr.bf16.gmra.mrb[0].mxu0 %v87
    %v177 = vpop.f32.mrb[0].mxu0
    %v178 = vadd.f32 0.0, %v177
    %v179 = vpop.f32.mrb[0].mxu0
    %v180 = vpop.f32.mrb[0].mxu0
    %v181 = vpop.f32.mrb[0].mxu0
    %182 = vdwg.mxu0
    %v187 = vunpack.c.l.b16 %v71
    %v188 = vunpack.c.h.b16 %v71
    %v189 = vunpack.c.l.b16 %v72
    %v190 = vunpack.c.l.b16 %v73
    %v191 = vunpack.c.h.b16 %v73
    %v192 = vunpack.c.l.b16 %v74
    %v193 = vpack.c.b16 %v190, %v187
    %v194 = vpack.c.b16 %v191, %v188
    %v195 = vpack.c.b16 %v192, %v189
    %vm196 = vcmask 80896
    %v198 = vsel %vm196, %v64, 0
    %vm200 = vcmask 1044480
    %v202 = vsel %vm200, %v193, 0
    %v205 = vsel %vm200, %v194, 0
    %v208 = vsel %vm200, %v195, 0
    %210 = vmatprep.subr.bf16.mxu0 %v205
    %211 = vmatpush1.bf16.msra.mxu0 %v202
    %212 = vmatprep.subr.bf16.mxu0 0
    %213 = vmatpush1.bf16.msra.mxu0 0
    %214 = vmatprep.subr.bf16.mxu0 0
    %215 = vmatpush1.bf16.msra.mxu0 0
    %216 = vmatprep.subr.bf16.mxu0 0
    %217 = vmatpush1.bf16.msra.mxu0 0
    %218 = vmatprep.subr.bf16.mxu0 0
    %219 = vmatpush1.bf16.msra.mxu0 0
    %220 = vmatprep.subr.bf16.mxu0 0
    %221 = vmatpush1.bf16.msra.mxu0 0
    %222 = vmatprep.subr.bf16.mxu0 0
    %223 = vmatpush1.bf16.msra.mxu0 0
    %224 = vmatprep.subr.bf16.mxu0 0
    %225 = vmatpush1.bf16.msra.mxu0 0
    %226 = vmatprep.subr.bf16.mxu0 0
    %227 = vmatpush1.bf16.msra.mxu0 0
    %228 = vmatprep.subr.bf16.mxu0 0
    %229 = vmatpush1.bf16.msra.mxu0 0
    %230 = vmatprep.subr.bf16.mxu0 0
    %231 = vmatpush1.bf16.msra.mxu0 0
    %232 = vmatprep.subr.bf16.mxu0 0
    %233 = vmatpush1.bf16.msra.mxu0 0
    %234 = vmatprep.subr.bf16.mxu0 0
    %235 = vmatpush1.bf16.msra.mxu0 0
    %236 = vmatprep.subr.bf16.mxu0 0
    %237 = vmatpush1.bf16.msra.mxu0 0
    %238 = vmatprep.subr.bf16.mxu0 0
    %239 = vmatpush1.bf16.msra.mxu0 0
    %240 = vmatprep.subr.bf16.mxu0 0
    %241 = vmatpush1.bf16.msra.mxu0 0
    %242 = vmatprep.mubr.bf16.mxu0 0
    %243 = vmatmul.mubr.bf16.gmra.mrb[0].mxu0 %v198
    %v244 = vpop.f32.mrb[0].mxu0
    %v245 = vadd.f32 %v137, %v244
    %v246 = vpop.f32.mrb[0].mxu0
    %v247 = vadd.f32 %v139, %v246
    %v248 = vpop.f32.mrb[0].mxu0
    %v249 = vpop.f32.mrb[0].mxu0
    %250 = vdwg.mxu0
    %251 = vmatprep.subr.bf16.mxu0 0
    %252 = vmatpush1.bf16.msra.mxu0 %v208
    %253 = vmatprep.subr.bf16.mxu0 0
    %254 = vmatpush1.bf16.msra.mxu0 0
    %255 = vmatprep.subr.bf16.mxu0 0
    %256 = vmatpush1.bf16.msra.mxu0 0
    %257 = vmatprep.subr.bf16.mxu0 0
    %258 = vmatpush1.bf16.msra.mxu0 0
    %259 = vmatprep.subr.bf16.mxu0 0
    %260 = vmatpush1.bf16.msra.mxu0 0
    %261 = vmatprep.subr.bf16.mxu0 0
    %262 = vmatpush1.bf16.msra.mxu0 0
    %263 = vmatprep.subr.bf16.mxu0 0
    %264 = vmatpush1.bf16.msra.mxu0 0
    %265 = vmatprep.subr.bf16.mxu0 0
    %266 = vmatpush1.bf16.msra.mxu0 0
    %267 = vmatprep.subr.bf16.mxu0 0
    %268 = vmatpush1.bf16.msra.mxu0 0
    %269 = vmatprep.subr.bf16.mxu0 0
    %270 = vmatpush1.bf16.msra.mxu0 0
    %271 = vmatprep.subr.bf16.mxu0 0
    %272 = vmatpush1.bf16.msra.mxu0 0
    %273 = vmatprep.subr.bf16.mxu0 0
    %274 = vmatpush1.bf16.msra.mxu0 0
    %275 = vmatprep.subr.bf16.mxu0 0
    %276 = vmatpush1.bf16.msra.mxu0 0
    %277 = vmatprep.subr.bf16.mxu0 0
    %278 = vmatpush1.bf16.msra.mxu0 0
    %279 = vmatprep.subr.bf16.mxu0 0
    %280 = vmatpush1.bf16.msra.mxu0 0
    %281 = vmatprep.subr.bf16.mxu0 0
    %282 = vmatpush1.bf16.msra.mxu0 0
    %283 = vmatprep.mubr.bf16.mxu0 0
    %284 = vmatmul.mubr.bf16.gmra.mrb[0].mxu0 %v198
    %v285 = vpop.f32.mrb[0].mxu0
    %v286 = vadd.f32 %v178, %v285
    %v287 = vpop.f32.mrb[0].mxu0
    %v288 = vpop.f32.mrb[0].mxu0
    %v289 = vpop.f32.mrb[0].mxu0
    %290 = vdwg.mxu0
    %v291 = vld [vmem:[%s5] sm:$0x77]
    %v292 = vld [vmem:[%s5 + $0x8] sm:$0x7]
    %v295 = vunpack.c.l.b16 %v291
    %v296 = vunpack.c.h.b16 %v291
    %v297 = vunpack.c.l.b16 %v292
    %v298 = vpack.c.b16 %v295, %v295
    %v299 = vpack.c.b16 %v296, %v296
    %v300 = vpack.c.b16 %v297, %v297
    %v302 = vsel %vm85, %v68, 0
    %v305 = vand.u32 %v298, %v92
    %v308 = vand.u32 %v299, %v92
    %v311 = vand.u32 %v300, %v92
    %313 = vmatprep.subr.bf16.mxu0 %v308
    %314 = vmatpush1.bf16.msra.mxu0 %v305
    %315 = vmatprep.subr.bf16.mxu0 0
    %316 = vmatpush1.bf16.msra.mxu0 0
    %317 = vmatprep.subr.bf16.mxu0 0
    %318 = vmatpush1.bf16.msra.mxu0 0
    %319 = vmatprep.subr.bf16.mxu0 0
    %320 = vmatpush1.bf16.msra.mxu0 0
    %321 = vmatprep.subr.bf16.mxu0 0
    %322 = vmatpush1.bf16.msra.mxu0 0
    %323 = vmatprep.subr.bf16.mxu0 0
    %324 = vmatpush1.bf16.msra.mxu0 0
    %325 = vmatprep.subr.bf16.mxu0 0
    %326 = vmatpush1.bf16.msra.mxu0 0
    %327 = vmatprep.subr.bf16.mxu0 0
    %328 = vmatpush1.bf16.msra.mxu0 0
    %329 = vmatprep.subr.bf16.mxu0 0
    %330 = vmatpush1.bf16.msra.mxu0 0
    %331 = vmatprep.subr.bf16.mxu0 0
    %332 = vmatpush1.bf16.msra.mxu0 0
    %333 = vmatprep.subr.bf16.mxu0 0
    %334 = vmatpush1.bf16.msra.mxu0 0
    %335 = vmatprep.subr.bf16.mxu0 0
    %336 = vmatpush1.bf16.msra.mxu0 0
    %337 = vmatprep.subr.bf16.mxu0 0
    %338 = vmatpush1.bf16.msra.mxu0 0
    %339 = vmatprep.subr.bf16.mxu0 0
    %340 = vmatpush1.bf16.msra.mxu0 0
    %341 = vmatprep.subr.bf16.mxu0 0
    %342 = vmatpush1.bf16.msra.mxu0 0
    %343 = vmatprep.subr.bf16.mxu0 0
    %344 = vmatpush1.bf16.msra.mxu0 0
    %345 = vmatprep.mubr.bf16.mxu0 0
    %346 = vmatmul.mubr.bf16.gmra.mrb[0].mxu0 %v302
    %v347 = vpop.f32.mrb[0].mxu0
    %v348 = vadd.f32 0.0, %v347
    %v349 = vpop.f32.mrb[0].mxu0
    %v350 = vadd.f32 0.0, %v349
    %v351 = vpop.f32.mrb[0].mxu0
    %v352 = vpop.f32.mrb[0].mxu0
    %353 = vdwg.mxu0
    %354 = vmatprep.subr.bf16.mxu0 0
    %355 = vmatpush1.bf16.msra.mxu0 %v311
    %356 = vmatprep.subr.bf16.mxu0 0
    %357 = vmatpush1.bf16.msra.mxu0 0
    %358 = vmatprep.subr.bf16.mxu0 0
    %359 = vmatpush1.bf16.msra.mxu0 0
    %360 = vmatprep.subr.bf16.mxu0 0
    %361 = vmatpush1.bf16.msra.mxu0 0
    %362 = vmatprep.subr.bf16.mxu0 0
    %363 = vmatpush1.bf16.msra.mxu0 0
    %364 = vmatprep.subr.bf16.mxu0 0
    %365 = vmatpush1.bf16.msra.mxu0 0
    %366 = vmatprep.subr.bf16.mxu0 0
    %367 = vmatpush1.bf16.msra.mxu0 0
    %368 = vmatprep.subr.bf16.mxu0 0
    %369 = vmatpush1.bf16.msra.mxu0 0
    %370 = vmatprep.subr.bf16.mxu0 0
    %371 = vmatpush1.bf16.msra.mxu0 0
    %372 = vmatprep.subr.bf16.mxu0 0
    %373 = vmatpush1.bf16.msra.mxu0 0
    %374 = vmatprep.subr.bf16.mxu0 0
    %375 = vmatpush1.bf16.msra.mxu0 0
    %376 = vmatprep.subr.bf16.mxu0 0
    %377 = vmatpush1.bf16.msra.mxu0 0
    %378 = vmatprep.subr.bf16.mxu0 0
    %379 = vmatpush1.bf16.msra.mxu0 0
    %380 = vmatprep.subr.bf16.mxu0 0
    %381 = vmatpush1.bf16.msra.mxu0 0
    %382 = vmatprep.subr.bf16.mxu0 0
    %383 = vmatpush1.bf16.msra.mxu0 0
    %384 = vmatprep.subr.bf16.mxu0 0
    %385 = vmatpush1.bf16.msra.mxu0 0
    %386 = vmatprep.mubr.bf16.mxu0 0
    %387 = vmatmul.mubr.bf16.gmra.mrb[0].mxu0 %v302
    %v388 = vpop.f32.mrb[0].mxu0
    %v389 = vadd.f32 0.0, %v388
    %v390 = vpop.f32.mrb[0].mxu0
    %v391 = vpop.f32.mrb[0].mxu0
    %v392 = vpop.f32.mrb[0].mxu0
    %393 = vdwg.mxu0
    %v394 = vadd.f32 %v245, %v348
    %v395 = vadd.f32 %v247, %v350
    %v396 = vadd.f32 %v286, %v389
    %v398 = vlaneseq
    %v399 = vshrl.u32 %v398, 7
    %v400 = vsub.s32 0, %v399
    %v401 = vrot.slane %v70, %v400
    %v402 = vlaneseq
    %v403 = vshrl.u32 %v402, 7
    %v404 = vsub.s32 2, %v403
    %v405 = vrot.slane %v70, %v404
    %v406 = vlaneseq
    %v407 = vshrl.u32 %v406, 7
    %v408 = vsub.s32 4, %v407
    %v409 = vrot.slane %v70, %v408
    %v413 = vlaneseq
    %v414 = vshrl.u32 %v413, 7
    %v415 = vsub.s32 0, %v414
    %v416 = vrot.slane %v401, %v415
    %v417 = vlaneseq
    %v418 = vshrl.u32 %v417, 7
    %v419 = vsub.s32 0, %v418
    %v420 = vrot.slane %v405, %v419
    %v421 = vlaneseq
    %v422 = vshrl.u32 %v421, 7
    %v423 = vsub.s32 0, %v422
    %v424 = vrot.slane %v409, %v423
    %v425 = vadd.f32 %v394, %v416
    %v426 = vadd.f32 %v395, %v420
    %v427 = vadd.f32 %v396, %v424
    %v428 = vmax.f32 %v425, 0.0
    %v429 = vmax.f32 %v426, 0.0
    %v430 = vmax.f32 %v427, 0.0
    %v431 = vpack.c.bf16 %v428, %v428
    %v432 = vpack.c.bf16 %v429, %v429
    %v433 = vpack.c.bf16 %v430, %v430
    %v434 = vld [vmem:[#allocation2] sm:$0xff]
    %v435 = vld [vmem:[#allocation2 + $0x8] sm:$0xf]
    %v436 = vld [vmem:[#allocation2 + $0xc] sm:$0xff]
    %v437 = vld [vmem:[#allocation2 + $0x14] sm:$0xf]
    %v438 = vld [vmem:[#allocation2 + $0x18] sm:$0xff]
    %v439 = vld [vmem:[#allocation2 + $0x20] sm:$0xf]
    %v440 = vld [vmem:[#allocation2 + $0x24] sm:$0xff]
    %v441 = vld [vmem:[#allocation2 + $0x2c] sm:$0xf]
    %v442 = vld [vmem:[#allocation2 + $0x30] sm:$0xff]
    %v443 = vld [vmem:[#allocation2 + $0x38] sm:$0xf]
    %v444 = vld [vmem:[#allocation2 + $0x3c] sm:$0xff]
    %v445 = vld [vmem:[#allocation2 + $0x44] sm:$0xf]
    %v446 = vld [vmem:[#allocation2 + $0x48] sm:$0xff]
    %v447 = vld [vmem:[#allocation2 + $0x50] sm:$0xf]
    %v448 = vld [vmem:[#allocation2 + $0x54] sm:$0xff]
    %v449 = vld [vmem:[#allocation2 + $0x5c] sm:$0xf]
    %v450 = vld [vmem:[#allocation2 + $0x60] sm:$0xff]
    %v451 = vld [vmem:[#allocation2 + $0x68] sm:$0xf]
    %v452 = vld [vmem:[#allocation2 + $0x6c] sm:$0xff]
    %v453 = vld [vmem:[#allocation2 + $0x74] sm:$0xf]
    %v454 = vld [vmem:[#allocation2 + $0x78] sm:$0xff]
    %v455 = vld [vmem:[#allocation2 + $0x80] sm:$0xf]
    %v456 = vld [vmem:[#allocation2 + $0x84] sm:$0xff]
    %v457 = vld [vmem:[#allocation2 + $0x8c] sm:$0xf]
    %v458 = vld [vmem:[#allocation2 + $0x90] sm:$0xff]
    %v459 = vld [vmem:[#allocation2 + $0x98] sm:$0xf]
    %v460 = vld [vmem:[#allocation2 + $0x9c] sm:$0xff]
    %v461 = vld [vmem:[#allocation2 + $0xa4] sm:$0xf]
    %v462 = vld [vmem:[#allocation2 + $0xa8] sm:$0xff]
    %v463 = vld [vmem:[#allocation2 + $0xb0] sm:$0xf]
    %v464 = vld [vmem:[#allocation2 + $0xb4] sm:$0xff]
    %v465 = vld [vmem:[#allocation2 + $0xbc] sm:$0xf]
    %v466 = vld [vmem:[#allocation2 + $0xc0] sm:$0xff]
    %v467 = vld [vmem:[#allocation2 + $0xc8] sm:$0xf]
    %v468 = vld [vmem:[#allocation2 + $0xcc] sm:$0xff]
    %v469 = vld [vmem:[#allocation2 + $0xd4] sm:$0xf]
    %v470 = vld [vmem:[#allocation2 + $0xd8] sm:$0xff]
    %v471 = vld [vmem:[#allocation2 + $0xe0] sm:$0xf]
    %v472 = vld [vmem:[#allocation2 + $0xe4] sm:$0xff]
    %v473 = vld [vmem:[#allocation2 + $0xec] sm:$0xf]
    %v474 = vld [vmem:[#allocation2 + $0xf0] sm:$0xff]
    %v475 = vld [vmem:[#allocation2 + $0xf8] sm:$0xf]
    %v476 = vld [vmem:[#allocation2 + $0xfc] sm:$0xff]
    %v477 = vld [vmem:[#allocation2 + $0x104] sm:$0xf]
    %v478 = vld [vmem:[#allocation2 + $0x108] sm:$0xff]
    %v479 = vld [vmem:[#allocation2 + $0x110] sm:$0xf]
    %v480 = vld [vmem:[#allocation2 + $0x114] sm:$0xff]
    %v481 = vld [vmem:[#allocation2 + $0x11c] sm:$0xf]
    %v482 = vld [vmem:[#allocation2 + $0x120] sm:$0xff]
    %v483 = vld [vmem:[#allocation2 + $0x128] sm:$0xf]
    %v484 = vld [vmem:[#allocation2 + $0x12c] sm:$0xff]
    %v485 = vld [vmem:[#allocation2 + $0x134] sm:$0xf]
    %v486 = vld [vmem:[#allocation2 + $0x138] sm:$0xff]
    %v487 = vld [vmem:[#allocation2 + $0x140] sm:$0xf]
    %v488 = vld [vmem:[#allocation2 + $0x144] sm:$0xff]
    %v489 = vld [vmem:[#allocation2 + $0x14c] sm:$0xf]
    %v490 = vld [vmem:[#allocation2 + $0x150] sm:$0xff]
    %v491 = vld [vmem:[#allocation2 + $0x158] sm:$0xf]
    %v492 = vld [vmem:[#allocation2 + $0x15c] sm:$0xff]
    %v493 = vld [vmem:[#allocation2 + $0x164] sm:$0xf]
    %v494 = vld [vmem:[#allocation2 + $0x168] sm:$0xff]
    %v495 = vld [vmem:[#allocation2 + $0x170] sm:$0xf]
    %v496 = vld [vmem:[#allocation2 + $0x174] sm:$0xff]
    %v497 = vld [vmem:[#allocation2 + $0x17c] sm:$0xf]
    %v498 = vld [vmem:[#allocation2 + $0x180] sm:$0xff]
    %v499 = vld [vmem:[#allocation2 + $0x188] sm:$0xf]
    %v500 = vld [vmem:[#allocation2 + $0x18c] sm:$0xff]
    %v501 = vld [vmem:[#allocation2 + $0x194] sm:$0xf]
    %v502 = vld [vmem:[#allocation2 + $0x198] sm:$0xff]
    %v503 = vld [vmem:[#allocation2 + $0x1a0] sm:$0xf]
    %v504 = vld [vmem:[#allocation2 + $0x1a4] sm:$0xff]
    %v505 = vld [vmem:[#allocation2 + $0x1ac] sm:$0xf]
    %v506 = vld [vmem:[#allocation2 + $0x1b0] sm:$0xff]
    %v507 = vld [vmem:[#allocation2 + $0x1b8] sm:$0xf]
    %v508 = vld [vmem:[#allocation2 + $0x1bc] sm:$0xff]
    %v509 = vld [vmem:[#allocation2 + $0x1c4] sm:$0xf]
    %v510 = vld [vmem:[#allocation2 + $0x1c8] sm:$0xff]
    %v511 = vld [vmem:[#allocation2 + $0x1d0] sm:$0xf]
    %v512 = vld [vmem:[#allocation2 + $0x1d4] sm:$0xff]
    %v513 = vld [vmem:[#allocation2 + $0x1dc] sm:$0xf]
    %v514 = vld [vmem:[#allocation2 + $0x1e0] sm:$0xff]
    %v515 = vld [vmem:[#allocation2 + $0x1e8] sm:$0xf]
    %v516 = vld [vmem:[#allocation2 + $0x1ec] sm:$0xff]
    %v517 = vld [vmem:[#allocation2 + $0x1f4] sm:$0xf]
    %v518 = vld [vmem:[#allocation2 + $0x1f8] sm:$0xff]
    %v519 = vld [vmem:[#allocation2 + $0x200] sm:$0xf]
    %v520 = vld [vmem:[#allocation2 + $0x204] sm:$0xff]
    %v521 = vld [vmem:[#allocation2 + $0x20c] sm:$0xf]
    %v522 = vld [vmem:[#allocation2 + $0x210] sm:$0xff]
    %v523 = vld [vmem:[#allocation2 + $0x218] sm:$0xf]
    %v524 = vld [vmem:[#allocation2 + $0x21c] sm:$0xff]
    %v525 = vld [vmem:[#allocation2 + $0x224] sm:$0xf]
    %v526 = vld [vmem:[#allocation2 + $0x228] sm:$0xff]
    %v527 = vld [vmem:[#allocation2 + $0x230] sm:$0xf]
    %v528 = vld [vmem:[#allocation2 + $0x234] sm:$0xff]
    %v529 = vld [vmem:[#allocation2 + $0x23c] sm:$0xf]
    %v530 = vlaneseq
    %v531 = vshrl.u32 %v530, 7
    %v532 = vsub.s32 1, %v531
    %v533 = vrot.slane %v70, %v532
    %v534 = vlaneseq
    %v535 = vshrl.u32 %v534, 7
    %v536 = vsub.s32 3, %v535
    %v537 = vrot.slane %v70, %v536
    %v538 = vlaneseq
    %v539 = vshrl.u32 %v538, 7
    %v540 = vsub.s32 5, %v539
    %v541 = vrot.slane %v70, %v540
    %v545 = vlaneseq
    %v546 = vshrl.u32 %v545, 7
    %v547 = vsub.s32 1, %v546
    %v548 = vrot.slane %v533, %v547
    %v549 = vlaneseq
    %v550 = vshrl.u32 %v549, 7
    %v551 = vsub.s32 1, %v550
    %v552 = vrot.slane %v537, %v551
    %v553 = vlaneseq
    %v554 = vshrl.u32 %v553, 7
    %v555 = vsub.s32 1, %v554
    %v556 = vrot.slane %v541, %v555
    %v653 = vunpack.c.l.b16 %v434
    %v654 = vunpack.c.h.b16 %v434
    %v655 = vunpack.c.l.b16 %v435
    %v656 = vunpack.c.l.b16 %v436
    %v657 = vunpack.c.h.b16 %v436
    %v658 = vunpack.c.l.b16 %v437
    %v659 = vunpack.c.l.b16 %v438
    %v660 = vunpack.c.h.b16 %v438
    %v661 = vunpack.c.l.b16 %v439
    %v662 = vunpack.c.l.b16 %v440
    %v663 = vunpack.c.h.b16 %v440
    %v664 = vunpack.c.l.b16 %v441
    %v665 = vunpack.c.l.b16 %v442
    %v666 = vunpack.c.h.b16 %v442
    %v667 = vunpack.c.l.b16 %v443
    %v668 = vunpack.c.l.b16 %v444
    %v669 = vunpack.c.h.b16 %v444
    %v670 = vunpack.c.l.b16 %v445
    %v671 = vunpack.c.l.b16 %v446
    %v672 = vunpack.c.h.b16 %v446
    %v673 = vunpack.c.l.b16 %v447
    %v674 = vunpack.c.l.b16 %v448
    %v675 = vunpack.c.h.b16 %v448
    %v676 = vunpack.c.l.b16 %v449
    %v677 = vunpack.c.l.b16 %v450
    %v678 = vunpack.c.h.b16 %v450
    %v679 = vunpack.c.l.b16 %v451
    %v680 = vunpack.c.l.b16 %v452
    %v681 = vunpack.c.h.b16 %v452
    %v682 = vunpack.c.l.b16 %v453
    %v683 = vunpack.c.l.b16 %v454
    %v684 = vunpack.c.h.b16 %v454
    %v685 = vunpack.c.l.b16 %v455
    %v686 = vunpack.c.l.b16 %v456
    %v687 = vunpack.c.h.b16 %v456
    %v688 = vunpack.c.l.b16 %v457
    %v689 = vunpack.c.l.b16 %v458
    %v690 = vunpack.c.h.b16 %v458
    %v691 = vunpack.c.l.b16 %v459
    %v692 = vunpack.c.l.b16 %v460
    %v693 = vunpack.c.h.b16 %v460
    %v694 = vunpack.c.l.b16 %v461
    %v695 = vunpack.c.l.b16 %v462
    %v696 = vunpack.c.h.b16 %v462
    %v697 = vunpack.c.l.b16 %v463
    %v698 = vunpack.c.l.b16 %v464
    %v699 = vunpack.c.h.b16 %v464
    %v700 = vunpack.c.l.b16 %v465
    %v701 = vunpack.c.l.b16 %v466
    %v702 = vunpack.c.h.b16 %v466
    %v703 = vunpack.c.l.b16 %v467
    %v704 = vunpack.c.l.b16 %v468
    %v705 = vunpack.c.h.b16 %v468
    %v706 = vunpack.c.l.b16 %v469
    %v707 = vunpack.c.l.b16 %v470
    %v708 = vunpack.c.h.b16 %v470
    %v709 = vunpack.c.l.b16 %v471
    %v710 = vunpack.c.l.b16 %v472
    %v711 = vunpack.c.h.b16 %v472
    %v712 = vunpack.c.l.b16 %v473
    %v713 = vunpack.c.l.b16 %v474
    %v714 = vunpack.c.h.b16 %v474
    %v715 = vunpack.c.l.b16 %v475
    %v716 = vunpack.c.l.b16 %v476
    %v717 = vunpack.c.h.b16 %v476
    %v718 = vunpack.c.l.b16 %v477
    %v719 = vunpack.c.l.b16 %v478
    %v720 = vunpack.c.h.b16 %v478
    %v721 = vunpack.c.l.b16 %v479
    %v722 = vunpack.c.l.b16 %v480
    %v723 = vunpack.c.h.b16 %v480
    %v724 = vunpack.c.l.b16 %v481
    %v725 = vunpack.c.l.b16 %v482
    %v726 = vunpack.c.h.b16 %v482
    %v727 = vunpack.c.l.b16 %v483
    %v728 = vunpack.c.l.b16 %v484
    %v729 = vunpack.c.h.b16 %v484
    %v730 = vunpack.c.l.b16 %v485
    %v731 = vunpack.c.l.b16 %v486
    %v732 = vunpack.c.h.b16 %v486
    %v733 = vunpack.c.l.b16 %v487
    %v734 = vunpack.c.l.b16 %v488
    %v735 = vunpack.c.h.b16 %v488
    %v736 = vunpack.c.l.b16 %v489
    %v737 = vunpack.c.l.b16 %v490
    %v738 = vunpack.c.h.b16 %v490
    %v739 = vunpack.c.l.b16 %v491
    %v740 = vunpack.c.l.b16 %v492
    %v741 = vunpack.c.h.b16 %v492
    %v742 = vunpack.c.l.b16 %v493
    %v743 = vunpack.c.l.b16 %v494
    %v744 = vunpack.c.h.b16 %v494
    %v745 = vunpack.c.l.b16 %v495
    %v746 = vunpack.c.l.b16 %v496
    %v747 = vunpack.c.h.b16 %v496
    %v748 = vunpack.c.l.b16 %v497
    %v749 = vunpack.c.l.b16 %v498
    %v750 = vunpack.c.h.b16 %v498
    %v751 = vunpack.c.l.b16 %v499
    %v752 = vunpack.c.l.b16 %v500
    %v753 = vunpack.c.h.b16 %v500
    %v754 = vunpack.c.l.b16 %v501
    %v755 = vunpack.c.l.b16 %v502
    %v756 = vunpack.c.h.b16 %v502
    %v757 = vunpack.c.l.b16 %v503
    %v758 = vunpack.c.l.b16 %v504
    %v759 = vunpack.c.h.b16 %v504
    %v760 = vunpack.c.l.b16 %v505
    %v761 = vunpack.c.l.b16 %v506
    %v762 = vunpack.c.h.b16 %v506
    %v763 = vunpack.c.l.b16 %v507
    %v764 = vunpack.c.l.b16 %v508
    %v765 = vunpack.c.h.b16 %v508
    %v766 = vunpack.c.l.b16 %v509
    %v767 = vunpack.c.l.b16 %v510
    %v768 = vunpack.c.h.b16 %v510
    %v769 = vunpack.c.l.b16 %v511
    %v770 = vunpack.c.l.b16 %v512
    %v771 = vunpack.c.h.b16 %v512
    %v772 = vunpack.c.l.b16 %v513
    %v773 = vunpack.c.l.b16 %v514
    %v774 = vunpack.c.h.b16 %v514
    %v775 = vunpack.c.l.b16 %v515
    %v776 = vunpack.c.l.b16 %v516
    %v777 = vunpack.c.h.b16 %v516
    %v778 = vunpack.c.l.b16 %v517
    %v779 = vunpack.c.l.b16 %v518
    %v780 = vunpack.c.h.b16 %v518
    %v781 = vunpack.c.l.b16 %v519
    %v782 = vunpack.c.l.b16 %v520
    %v783 = vunpack.c.h.b16 %v520
    %v784 = vunpack.c.l.b16 %v521
    %v785 = vunpack.c.l.b16 %v522
    %v786 = vunpack.c.h.b16 %v522
    %v787 = vunpack.c.l.b16 %v523
    %v788 = vunpack.c.l.b16 %v524
    %v789 = vunpack.c.h.b16 %v524
    %v790 = vunpack.c.l.b16 %v525
    %v791 = vunpack.c.l.b16 %v526
    %v792 = vunpack.c.h.b16 %v526
    %v793 = vunpack.c.l.b16 %v527
    %v794 = vunpack.c.l.b16 %v528
    %v795 = vunpack.c.h.b16 %v528
    %v796 = vunpack.c.l.b16 %v529
    %v797 = vpack.c.b16 %v656, %v653
    %v798 = vpack.c.b16 %v657, %v654
    %v799 = vpack.c.b16 %v658, %v655
    %v800 = vpack.c.b16 %v662, %v659
    %v801 = vpack.c.b16 %v663, %v660
    %v802 = vpack.c.b16 %v664, %v661
    %v803 = vpack.c.b16 %v668, %v665
    %v804 = vpack.c.b16 %v669, %v666
    %v805 = vpack.c.b16 %v670, %v667
    %v806 = vpack.c.b16 %v674, %v671
    %v807 = vpack.c.b16 %v675, %v672
    %v808 = vpack.c.b16 %v676, %v673
    %v809 = vpack.c.b16 %v680, %v677
    %v810 = vpack.c.b16 %v681, %v678
    %v811 = vpack.c.b16 %v682, %v679
    %v812 = vpack.c.b16 %v686, %v683
    %v813 = vpack.c.b16 %v687, %v684
    %v814 = vpack.c.b16 %v688, %v685
    %v815 = vpack.c.b16 %v692, %v689
    %v816 = vpack.c.b16 %v693, %v690
    %v817 = vpack.c.b16 %v694, %v691
    %v818 = vpack.c.b16 %v698, %v695
    %v819 = vpack.c.b16 %v699, %v696
    %v820 = vpack.c.b16 %v700, %v697
    %v821 = vpack.c.b16 %v704, %v701
    %v822 = vpack.c.b16 %v705, %v702
    %v823 = vpack.c.b16 %v706, %v703
    %v824 = vpack.c.b16 %v710, %v707
    %v825 = vpack.c.b16 %v711, %v708
    %v826 = vpack.c.b16 %v712, %v709
    %v827 = vpack.c.b16 %v716, %v713
    %v828 = vpack.c.b16 %v717, %v714
    %v829 = vpack.c.b16 %v718, %v715
    %v830 = vpack.c.b16 %v722, %v719
    %v831 = vpack.c.b16 %v723, %v720
    %v832 = vpack.c.b16 %v724, %v721
    %v833 = vpack.c.b16 %v728, %v725
    %v834 = vpack.c.b16 %v729, %v726
    %v835 = vpack.c.b16 %v730, %v727
    %v836 = vpack.c.b16 %v734, %v731
    %v837 = vpack.c.b16 %v735, %v732
    %v838 = vpack.c.b16 %v736, %v733
    %v839 = vpack.c.b16 %v740, %v737
    %v840 = vpack.c.b16 %v741, %v738
    %v841 = vpack.c.b16 %v742, %v739
    %v842 = vpack.c.b16 %v746, %v743
    %v843 = vpack.c.b16 %v747, %v744
    %v844 = vpack.c.b16 %v748, %v745
    %v845 = vpack.c.b16 %v752, %v749
    %v846 = vpack.c.b16 %v753, %v750
    %v847 = vpack.c.b16 %v754, %v751
    %v848 = vpack.c.b16 %v758, %v755
    %v849 = vpack.c.b16 %v759, %v756
    %v850 = vpack.c.b16 %v760, %v757
    %v851 = vpack.c.b16 %v764, %v761
    %v852 = vpack.c.b16 %v765, %v762
    %v853 = vpack.c.b16 %v766, %v763
    %v854 = vpack.c.b16 %v770, %v767
    %v855 = vpack.c.b16 %v771, %v768
    %v856 = vpack.c.b16 %v772, %v769
    %v857 = vpack.c.b16 %v776, %v773
    %v858 = vpack.c.b16 %v777, %v774
    %v859 = vpack.c.b16 %v778, %v775
    %v860 = vpack.c.b16 %v782, %v779
    %v861 = vpack.c.b16 %v783, %v780
    %v862 = vpack.c.b16 %v784, %v781
    %v863 = vpack.c.b16 %v788, %v785
    %v864 = vpack.c.b16 %v789, %v786
    %v865 = vpack.c.b16 %v790, %v787
    %v866 = vpack.c.b16 %v794, %v791
    %v867 = vpack.c.b16 %v795, %v792
    %v868 = vpack.c.b16 %v796, %v793
    %941 = vmatprep.subr.bf16.mxu0 %v798
    %942 = vmatpush1.bf16.msra.mxu0 %v797
    %943 = vmatprep.subr.bf16.mxu0 %v801
    %944 = vmatpush1.bf16.msra.mxu0 %v800
    %945 = vmatprep.subr.bf16.mxu0 %v804
    %946 = vmatpush1.bf16.msra.mxu0 %v803
    %947 = vmatprep.subr.bf16.mxu0 %v807
    %948 = vmatpush1.bf16.msra.mxu0 %v806
    %949 = vmatprep.subr.bf16.mxu0 %v810
    %950 = vmatpush1.bf16.msra.mxu0 %v809
    %951 = vmatprep.subr.bf16.mxu0 %v813
    %952 = vmatpush1.bf16.msra.mxu0 %v812
    %953 = vmatprep.subr.bf16.mxu0 %v816
    %954 = vmatpush1.bf16.msra.mxu0 %v815
    %955 = vmatprep.subr.bf16.mxu0 %v819
    %956 = vmatpush1.bf16.msra.mxu0 %v818
    %957 = vmatprep.subr.bf16.mxu0 %v822
    %958 = vmatpush1.bf16.msra.mxu0 %v821
    %959 = vmatprep.subr.bf16.mxu0 %v825
    %960 = vmatpush1.bf16.msra.mxu0 %v824
    %961 = vmatprep.subr.bf16.mxu0 %v828
    %962 = vmatpush1.bf16.msra.mxu0 %v827
    %963 = vmatprep.subr.bf16.mxu0 %v831
    %964 = vmatpush1.bf16.msra.mxu0 %v830
    %965 = vmatprep.subr.bf16.mxu0 %v834
    %966 = vmatpush1.bf16.msra.mxu0 %v833
    %967 = vmatprep.subr.bf16.mxu0 %v837
    %968 = vmatpush1.bf16.msra.mxu0 %v836
    %969 = vmatprep.subr.bf16.mxu0 %v840
    %970 = vmatpush1.bf16.msra.mxu0 %v839
    %971 = vmatprep.subr.bf16.mxu0 %v843
    %972 = vmatpush1.bf16.msra.mxu0 %v842
    %973 = vmatprep.mubr.bf16.mxu0 %v432
    %974 = vmatmul.mubr.bf16.gmra.mrb[0].mxu0 %v431
    %v975 = vpop.f32.mrb[0].mxu0
    %v976 = vadd.f32 %v548, %v975
    %v977 = vpop.f32.mrb[0].mxu0
    %v978 = vadd.f32 %v552, %v977
    %v979 = vpop.f32.mrb[0].mxu0
    %v980 = vpop.f32.mrb[0].mxu0
    %981 = vdwg.mxu0
    %982 = vmatprep.subr.bf16.mxu0 %v846
    %983 = vmatpush1.bf16.msra.mxu0 %v845
    %984 = vmatprep.subr.bf16.mxu0 %v849
    %985 = vmatpush1.bf16.msra.mxu0 %v848
    %986 = vmatprep.subr.bf16.mxu0 %v852
    %987 = vmatpush1.bf16.msra.mxu0 %v851
    %988 = vmatprep.subr.bf16.mxu0 %v855
    %989 = vmatpush1.bf16.msra.mxu0 %v854
    %990 = vmatprep.subr.bf16.mxu0 %v858
    %991 = vmatpush1.bf16.msra.mxu0 %v857
    %992 = vmatprep.subr.bf16.mxu0 %v861
    %993 = vmatpush1.bf16.msra.mxu0 %v860
    %994 = vmatprep.subr.bf16.mxu0 %v864
    %995 = vmatpush1.bf16.msra.mxu0 %v863
    %996 = vmatprep.subr.bf16.mxu0 %v867
    %997 = vmatpush1.bf16.msra.mxu0 %v866
    %998 = vmatprep.subr.bf16.mxu0 0
    %999 = vmatpush1.bf16.msra.mxu0 0
    %1000 = vmatprep.subr.bf16.mxu0 0
    %1001 = vmatpush1.bf16.msra.mxu0 0
    %1002 = vmatprep.subr.bf16.mxu0 0
    %1003 = vmatpush1.bf16.msra.mxu0 0
    %1004 = vmatprep.subr.bf16.mxu0 0
    %1005 = vmatpush1.bf16.msra.mxu0 0
    %1006 = vmatprep.subr.bf16.mxu0 0
    %1007 = vmatpush1.bf16.msra.mxu0 0
    %1008 = vmatprep.subr.bf16.mxu0 0
    %1009 = vmatpush1.bf16.msra.mxu0 0
    %1010 = vmatprep.subr.bf16.mxu0 0
    %1011 = vmatpush1.bf16.msra.mxu0 0
    %1012 = vmatprep.subr.bf16.mxu0 0
    %1013 = vmatpush1.bf16.msra.mxu0 0
    %1014 = vmatprep.mubr.bf16.mxu0 0
    %1015 = vmatmul.mubr.bf16.gmra.mrb[0].mxu0 %v433
    %v1016 = vpop.f32.mrb[0].mxu0
    %v1017 = vadd.f32 %v976, %v1016
    %v1018 = vpop.f32.mrb[0].mxu0
    %v1019 = vadd.f32 %v978, %v1018
    %v1020 = vpop.f32.mrb[0].mxu0
    %v1021 = vpop.f32.mrb[0].mxu0
    %1022 = vdwg.mxu0
    %1023 = vmatprep.subr.bf16.mxu0 0
    %1024 = vmatpush1.bf16.msra.mxu0 %v799
    %1025 = vmatprep.subr.bf16.mxu0 0
    %1026 = vmatpush1.bf16.msra.mxu0 %v802
    %1027 = vmatprep.subr.bf16.mxu0 0
    %1028 = vmatpush1.bf16.msra.mxu0 %v805
    %1029 = vmatprep.subr.bf16.mxu0 0
    %1030 = vmatpush1.bf16.msra.mxu0 %v808
    %1031 = vmatprep.subr.bf16.mxu0 0
    %1032 = vmatpush1.bf16.msra.mxu0 %v811
    %1033 = vmatprep.subr.bf16.mxu0 0
    %1034 = vmatpush1.bf16.msra.mxu0 %v814
    %1035 = vmatprep.subr.bf16.mxu0 0
    %1036 = vmatpush1.bf16.msra.mxu0 %v817
    %1037 = vmatprep.subr.bf16.mxu0 0
    %1038 = vmatpush1.bf16.msra.mxu0 %v820
    %1039 = vmatprep.subr.bf16.mxu0 0
    %1040 = vmatpush1.bf16.msra.mxu0 %v823
    %1041 = vmatprep.subr.bf16.mxu0 0
    %1042 = vmatpush1.bf16.msra.mxu0 %v826
    %1043 = vmatprep.subr.bf16.mxu0 0
    %1044 = vmatpush1.bf16.msra.mxu0 %v829
    %1045 = vmatprep.subr.bf16.mxu0 0
    %1046 = vmatpush1.bf16.msra.mxu0 %v832
    %1047 = vmatprep.subr.bf16.mxu0 0
    %1048 = vmatpush1.bf16.msra.mxu0 %v835
    %1049 = vmatprep.subr.bf16.mxu0 0
    %1050 = vmatpush1.bf16.msra.mxu0 %v838
    %1051 = vmatprep.subr.bf16.mxu0 0
    %1052 = vmatpush1.bf16.msra.mxu0 %v841
    %1053 = vmatprep.subr.bf16.mxu0 0
    %1054 = vmatpush1.bf16.msra.mxu0 %v844
    %1055 = vmatprep.mubr.bf16.mxu0 %v432
    %1056 = vmatmul.mubr.bf16.gmra.mrb[0].mxu0 %v431
    %v1057 = vpop.f32.mrb[0].mxu0
    %v1058 = vadd.f32 %v556, %v1057
    %v1059 = vpop.f32.mrb[0].mxu0
    %v1060 = vpop.f32.mrb[0].mxu0
    %v1061 = vpop.f32.mrb[0].mxu0
    %1062 = vdwg.mxu0
    %1063 = vmatprep.subr.bf16.mxu0 0
    %1064 = vmatpush1.bf16.msra.mxu0 %v847
    %1065 = vmatprep.subr.bf16.mxu0 0
    %1066 = vmatpush1.bf16.msra.mxu0 %v850
    %1067 = vmatprep.subr.bf16.mxu0 0
    %1068 = vmatpush1.bf16.msra.mxu0 %v853
    %1069 = vmatprep.subr.bf16.mxu0 0
    %1070 = vmatpush1.bf16.msra.mxu0 %v856
    %1071 = vmatprep.subr.bf16.mxu0 0
    %1072 = vmatpush1.bf16.msra.mxu0 %v859
    %1073 = vmatprep.subr.bf16.mxu0 0
    %1074 = vmatpush1.bf16.msra.mxu0 %v862
    %1075 = vmatprep.subr.bf16.mxu0 0
    %1076 = vmatpush1.bf16.msra.mxu0 %v865
    %1077 = vmatprep.subr.bf16.mxu0 0
    %1078 = vmatpush1.bf16.msra.mxu0 %v868
    %1079 = vmatprep.subr.bf16.mxu0 0
    %1080 = vmatpush1.bf16.msra.mxu0 0
    %1081 = vmatprep.subr.bf16.mxu0 0
    %1082 = vmatpush1.bf16.msra.mxu0 0
    %1083 = vmatprep.subr.bf16.mxu0 0
    %1084 = vmatpush1.bf16.msra.mxu0 0
    %1085 = vmatprep.subr.bf16.mxu0 0
    %1086 = vmatpush1.bf16.msra.mxu0 0
    %1087 = vmatprep.subr.bf16.mxu0 0
    %1088 = vmatpush1.bf16.msra.mxu0 0
    %1089 = vmatprep.subr.bf16.mxu0 0
    %1090 = vmatpush1.bf16.msra.mxu0 0
    %1091 = vmatprep.subr.bf16.mxu0 0
    %1092 = vmatpush1.bf16.msra.mxu0 0
    %1093 = vmatprep.subr.bf16.mxu0 0
    %1094 = vmatpush1.bf16.msra.mxu0 0
    %1095 = vmatprep.mubr.bf16.mxu0 0
    %1096 = vmatmul.mubr.bf16.gmra.mrb[0].mxu0 %v433
    %v1097 = vpop.f32.mrb[0].mxu0
    %v1098 = vadd.f32 %v1058, %v1097
    %v1099 = vpop.f32.mrb[0].mxu0
    %v1100 = vpop.f32.mrb[0].mxu0
    %v1101 = vpop.f32.mrb[0].mxu0
    %1102 = vdwg.mxu0
    %v1103 = vmax.f32 %v1017, 0.0
    %v1104 = vmax.f32 %v1019, 0.0
    %v1105 = vmax.f32 %v1098, 0.0
    %v1106 = vpack.c.bf16 %v1103, %v1103
    %v1107 = vpack.c.bf16 %v1104, %v1104
    %v1108 = vpack.c.bf16 %v1105, %v1105
    %v1109 = vld [vmem:[%s8] sm:$0xf]
    %v1110 = vld [vmem:[%s8 + $0x4] sm:$0xf]
    %v1111 = vld [vmem:[%s8 + $0x8] sm:$0xf]
    %v1112 = vld [vmem:[%s8 + $0xc] sm:$0xf]
    %v1113 = vld [vmem:[%s8 + $0x10] sm:$0xf]
    %v1114 = vld [vmem:[%s8 + $0x14] sm:$0xf]
    %v1115 = vld [vmem:[%s8 + $0x18] sm:$0xf]
    %v1116 = vld [vmem:[%s8 + $0x1c] sm:$0xf]
    %v1117 = vld [vmem:[%s8 + $0x20] sm:$0xf]
    %v1118 = vld [vmem:[%s8 + $0x24] sm:$0xf]
    %v1119 = vld [vmem:[%s8 + $0x28] sm:$0xf]
    %v1120 = vld [vmem:[%s8 + $0x2c] sm:$0xf]
    %v1121 = vld [vmem:[%s8 + $0x30] sm:$0xf]
    %v1122 = vld [vmem:[%s8 + $0x34] sm:$0xf]
    %v1123 = vld [vmem:[%s8 + $0x38] sm:$0xf]
    %v1124 = vld [vmem:[%s8 + $0x3c] sm:$0xf]
    %v1125 = vld [vmem:[%s8 + $0x40] sm:$0xf]
    %v1126 = vld [vmem:[%s8 + $0x44] sm:$0xf]
    %v1127 = vld [vmem:[%s8 + $0x48] sm:$0xf]
    %v1128 = vld [vmem:[%s8 + $0x4c] sm:$0xf]
    %v1129 = vld [vmem:[%s8 + $0x50] sm:$0xf]
    %v1130 = vld [vmem:[%s8 + $0x54] sm:$0xf]
    %v1131 = vld [vmem:[%s8 + $0x58] sm:$0xf]
    %v1132 = vld [vmem:[%s8 + $0x5c] sm:$0xf]
    %v1133 = vld [vmem:[%s8 + $0x60] sm:$0xf]
    %v1134 = vld [vmem:[%s8 + $0x64] sm:$0xf]
    %v1135 = vld [vmem:[%s8 + $0x68] sm:$0xf]
    %v1136 = vld [vmem:[%s8 + $0x6c] sm:$0xf]
    %v1137 = vld [vmem:[%s8 + $0x70] sm:$0xf]
    %v1138 = vld [vmem:[%s8 + $0x74] sm:$0xf]
    %v1139 = vld [vmem:[%s8 + $0x78] sm:$0xf]
    %v1140 = vld [vmem:[%s8 + $0x7c] sm:$0xf]
    %v1141 = vld [vmem:[%s8 + $0x80] sm:$0xf]
    %v1142 = vld [vmem:[%s8 + $0x84] sm:$0xf]
    %v1143 = vld [vmem:[%s8 + $0x88] sm:$0xf]
    %v1144 = vld [vmem:[%s8 + $0x8c] sm:$0xf]
    %v1145 = vld [vmem:[%s8 + $0x90] sm:$0xf]
    %v1146 = vld [vmem:[%s8 + $0x94] sm:$0xf]
    %v1147 = vld [vmem:[%s8 + $0x98] sm:$0xf]
    %v1148 = vld [vmem:[%s8 + $0x9c] sm:$0xf]
    %v1149 = vld [vmem:[%s8 + $0xa0] sm:$0xf]
    %v1150 = vld [vmem:[%s8 + $0xa4] sm:$0xf]
    %v1151 = vld [vmem:[%s8 + $0xa8] sm:$0xf]
    %v1152 = vld [vmem:[%s8 + $0xac] sm:$0xf]
    %v1153 = vld [vmem:[%s8 + $0xb0] sm:$0xf]
    %v1154 = vld [vmem:[%s8 + $0xb4] sm:$0xf]
    %v1155 = vld [vmem:[%s8 + $0xb8] sm:$0xf]
    %v1156 = vld [vmem:[%s8 + $0xbc] sm:$0xf]
    %s1157 = sld [smem:[#allocation5 + %s69]]
    %v1158 = vstv %s1157
    %v1207 = vunpack.c.l.b16 %v1109
    %v1208 = vunpack.c.l.b16 %v1110
    %v1209 = vunpack.c.l.b16 %v1111
    %v1210 = vunpack.c.l.b16 %v1112
    %v1211 = vunpack.c.l.b16 %v1113
    %v1212 = vunpack.c.l.b16 %v1114
    %v1213 = vunpack.c.l.b16 %v1115
    %v1214 = vunpack.c.l.b16 %v1116
    %v1215 = vunpack.c.l.b16 %v1117
    %v1216 = vunpack.c.l.b16 %v1118
    %v1217 = vunpack.c.l.b16 %v1119
    %v1218 = vunpack.c.l.b16 %v1120
    %v1219 = vunpack.c.l.b16 %v1121
    %v1220 = vunpack.c.l.b16 %v1122
    %v1221 = vunpack.c.l.b16 %v1123
    %v1222 = vunpack.c.l.b16 %v1124
    %v1223 = vunpack.c.l.b16 %v1125
    %v1224 = vunpack.c.l.b16 %v1126
    %v1225 = vunpack.c.l.b16 %v1127
    %v1226 = vunpack.c.l.b16 %v1128
    %v1227 = vunpack.c.l.b16 %v1129
    %v1228 = vunpack.c.l.b16 %v1130
    %v1229 = vunpack.c.l.b16 %v1131
    %v1230 = vunpack.c.l.b16 %v1132
    %v1231 = vunpack.c.l.b16 %v1133
    %v1232 = vunpack.c.l.b16 %v1134
    %v1233 = vunpack.c.l.b16 %v1135
    %v1234 = vunpack.c.l.b16 %v1136
    %v1235 = vunpack.c.l.b16 %v1137
    %v1236 = vunpack.c.l.b16 %v1138
    %v1237 = vunpack.c.l.b16 %v1139
    %v1238 = vunpack.c.l.b16 %v1140
    %v1239 = vunpack.c.l.b16 %v1141
    %v1240 = vunpack.c.l.b16 %v1142
    %v1241 = vunpack.c.l.b16 %v1143
    %v1242 = vunpack.c.l.b16 %v1144
    %v1243 = vunpack.c.l.b16 %v1145
    %v1244 = vunpack.c.l.b16 %v1146
    %v1245 = vunpack.c.l.b16 %v1147
    %v1246 = vunpack.c.l.b16 %v1148
    %v1247 = vunpack.c.l.b16 %v1149
    %v1248 = vunpack.c.l.b16 %v1150
    %v1249 = vunpack.c.l.b16 %v1151
    %v1250 = vunpack.c.l.b16 %v1152
    %v1251 = vunpack.c.l.b16 %v1153
    %v1252 = vunpack.c.l.b16 %v1154
    %v1253 = vunpack.c.l.b16 %v1155
    %v1254 = vunpack.c.l.b16 %v1156
    %v1255 = vpack.c.b16 %v1208, %v1207
    %v1256 = vpack.c.b16 %v1210, %v1209
    %v1257 = vpack.c.b16 %v1212, %v1211
    %v1258 = vpack.c.b16 %v1214, %v1213
    %v1259 = vpack.c.b16 %v1216, %v1215
    %v1260 = vpack.c.b16 %v1218, %v1217
    %v1261 = vpack.c.b16 %v1220, %v1219
    %v1262 = vpack.c.b16 %v1222, %v1221
    %v1263 = vpack.c.b16 %v1224, %v1223
    %v1264 = vpack.c.b16 %v1226, %v1225
    %v1265 = vpack.c.b16 %v1228, %v1227
    %v1266 = vpack.c.b16 %v1230, %v1229
    %v1267 = vpack.c.b16 %v1232, %v1231
    %v1268 = vpack.c.b16 %v1234, %v1233
    %v1269 = vpack.c.b16 %v1236, %v1235
    %v1270 = vpack.c.b16 %v1238, %v1237
    %v1271 = vpack.c.b16 %v1240, %v1239
    %v1272 = vpack.c.b16 %v1242, %v1241
    %v1273 = vpack.c.b16 %v1244, %v1243
    %v1274 = vpack.c.b16 %v1246, %v1245
    %v1275 = vpack.c.b16 %v1248, %v1247
    %v1276 = vpack.c.b16 %v1250, %v1249
    %v1277 = vpack.c.b16 %v1252, %v1251
    %v1278 = vpack.c.b16 %v1254, %v1253
    %1303 = vmatprep.subr.bf16.mxu0 0
    %1304 = vmatpush1.bf16.msra.mxu0 %v1255
    %1305 = vmatprep.subr.bf16.mxu0 0
    %1306 = vmatpush1.bf16.msra.mxu0 %v1256
    %1307 = vmatprep.subr.bf16.mxu0 0
    %1308 = vmatpush1.bf16.msra.mxu0 %v1257
    %1309 = vmatprep.subr.bf16.mxu0 0
    %1310 = vmatpush1.bf16.msra.mxu0 %v1258
    %1311 = vmatprep.subr.bf16.mxu0 0
    %1312 = vmatpush1.bf16.msra.mxu0 %v1259
    %1313 = vmatprep.subr.bf16.mxu0 0
    %1314 = vmatpush1.bf16.msra.mxu0 %v1260
    %1315 = vmatprep.subr.bf16.mxu0 0
    %1316 = vmatpush1.bf16.msra.mxu0 %v1261
    %1317 = vmatprep.subr.bf16.mxu0 0
    %1318 = vmatpush1.bf16.msra.mxu0 %v1262
    %1319 = vmatprep.subr.bf16.mxu0 0
    %1320 = vmatpush1.bf16.msra.mxu0 %v1263
    %1321 = vmatprep.subr.bf16.mxu0 0
    %1322 = vmatpush1.bf16.msra.mxu0 %v1264
    %1323 = vmatprep.subr.bf16.mxu0 0
    %1324 = vmatpush1.bf16.msra.mxu0 %v1265
    %1325 = vmatprep.subr.bf16.mxu0 0
    %1326 = vmatpush1.bf16.msra.mxu0 %v1266
    %1327 = vmatprep.subr.bf16.mxu0 0
    %1328 = vmatpush1.bf16.msra.mxu0 %v1267
    %1329 = vmatprep.subr.bf16.mxu0 0
    %1330 = vmatpush1.bf16.msra.mxu0 %v1268
    %1331 = vmatprep.subr.bf16.mxu0 0
    %1332 = vmatpush1.bf16.msra.mxu0 %v1269
    %1333 = vmatprep.subr.bf16.mxu0 0
    %1334 = vmatpush1.bf16.msra.mxu0 %v1270
    %1335 = vmatprep.mubr.bf16.mxu0 %v1107
    %1336 = vmatmul.mubr.bf16.gmra.mrb[0].mxu0 %v1106
    %v1337 = vpop.f32.mrb[0].mxu0
    %v1338 = vadd.f32 %v1158, %v1337
    %v1339 = vpop.f32.mrb[0].mxu0
    %v1340 = vpop.f32.mrb[0].mxu0
    %v1341 = vpop.f32.mrb[0].mxu0
    %1342 = vdwg.mxu0
    %1343 = vmatprep.subr.bf16.mxu0 0
    %1344 = vmatpush1.bf16.msra.mxu0 %v1271
    %1345 = vmatprep.subr.bf16.mxu0 0
    %1346 = vmatpush1.bf16.msra.mxu0 %v1272
    %1347 = vmatprep.subr.bf16.mxu0 0
    %1348 = vmatpush1.bf16.msra.mxu0 %v1273
    %1349 = vmatprep.subr.bf16.mxu0 0
    %1350 = vmatpush1.bf16.msra.mxu0 %v1274
    %1351 = vmatprep.subr.bf16.mxu0 0
    %1352 = vmatpush1.bf16.msra.mxu0 %v1275
    %1353 = vmatprep.subr.bf16.mxu0 0
    %1354 = vmatpush1.bf16.msra.mxu0 %v1276
    %1355 = vmatprep.subr.bf16.mxu0 0
    %1356 = vmatpush1.bf16.msra.mxu0 %v1277
    %1357 = vmatprep.subr.bf16.mxu0 0
    %1358 = vmatpush1.bf16.msra.mxu0 %v1278
    %1359 = vmatprep.subr.bf16.mxu0 0
    %1360 = vmatpush1.bf16.msra.mxu0 0
    %1361 = vmatprep.subr.bf16.mxu0 0
    %1362 = vmatpush1.bf16.msra.mxu0 0
    %1363 = vmatprep.subr.bf16.mxu0 0
    %1364 = vmatpush1.bf16.msra.mxu0 0
    %1365 = vmatprep.subr.bf16.mxu0 0
    %1366 = vmatpush1.bf16.msra.mxu0 0
    %1367 = vmatprep.subr.bf16.mxu0 0
    %1368 = vmatpush1.bf16.msra.mxu0 0
    %1369 = vmatprep.subr.bf16.mxu0 0
    %1370 = vmatpush1.bf16.msra.mxu0 0
    %1371 = vmatprep.subr.bf16.mxu0 0
    %1372 = vmatpush1.bf16.msra.mxu0 0
    %1373 = vmatprep.subr.bf16.mxu0 0
    %1374 = vmatpush1.bf16.msra.mxu0 0
    %1375 = vmatprep.mubr.bf16.mxu0 0
    %1376 = vmatmul.mubr.bf16.gmra.mrb[0].mxu0 %v1108
    %v1377 = vpop.f32.mrb[0].mxu0
    %v1378 = vadd.f32 %v1338, %v1377
    %v1379 = vpop.f32.mrb[0].mxu0
    %v1380 = vpop.f32.mrb[0].mxu0
    %v1381 = vpop.f32.mrb[0].mxu0
    %1382 = vdwg.mxu0
    %vm1383 = vcmask 7168
    %1384 = vst.msk [vmem:[%s10] sm:$0xff] %vm1383, %v1378
    %s1385 = scalar_lea.vmem %s6, 6
    %v1386 = vld [vmem:[%s1385] sm:$0x3f]
    %s1387 = scalar_lea.vmem %s3, 24
    %v1388 = vld [vmem:[%s1387] sm:$0xff]
    %v1389 = vld [vmem:[%s1387 + $0x8] sm:$0xf]
    %v1390 = vld [vmem:[%s1387 + $0xc] sm:$0x11]
    %v1391 = vld [vmem:[%s1387 + $0x14] sm:$0x1]
    %s1392 = scalar_lea.vmem %s4, 12
    %v1393 = vld [vmem:[%s1392] sm:$0x77]
    %v1394 = vld [vmem:[%s1392 + $0x8] sm:$0x7]
    %v1397 = vunpack.c.l.b16 %v1393
    %v1398 = vunpack.c.h.b16 %v1393
    %v1399 = vunpack.c.l.b16 %v1394
    %v1400 = vpack.c.b16 %v1397, %v1397
    %v1401 = vpack.c.b16 %v1398, %v1398
    %v1402 = vpack.c.b16 %v1399, %v1399
    %v1404 = vand.u32 %v1400, %v92
    %v1407 = vand.u32 %v1401, %v92
    %v1410 = vand.u32 %v1402, %v92
    %1412 = vmatprep.subr.bf16.mxu0 %v1407
    %1413 = vmatpush1.bf16.msra.mxu0 %v1404
    %1414 = vmatprep.subr.bf16.mxu0 0
    %1415 = vmatpush1.bf16.msra.mxu0 0
    %1416 = vmatprep.subr.bf16.mxu0 0
    %1417 = vmatpush1.bf16.msra.mxu0 0
    %1418 = vmatprep.subr.bf16.mxu0 0
    %1419 = vmatpush1.bf16.msra.mxu0 0
    %1420 = vmatprep.subr.bf16.mxu0 0
    %1421 = vmatpush1.bf16.msra.mxu0 0
    %1422 = vmatprep.subr.bf16.mxu0 0
    %1423 = vmatpush1.bf16.msra.mxu0 0
    %1424 = vmatprep.subr.bf16.mxu0 0
    %1425 = vmatpush1.bf16.msra.mxu0 0
    %1426 = vmatprep.subr.bf16.mxu0 0
    %1427 = vmatpush1.bf16.msra.mxu0 0
    %1428 = vmatprep.subr.bf16.mxu0 0
    %1429 = vmatpush1.bf16.msra.mxu0 0
    %1430 = vmatprep.subr.bf16.mxu0 0
    %1431 = vmatpush1.bf16.msra.mxu0 0
    %1432 = vmatprep.subr.bf16.mxu0 0
    %1433 = vmatpush1.bf16.msra.mxu0 0
    %1434 = vmatprep.subr.bf16.mxu0 0
    %1435 = vmatpush1.bf16.msra.mxu0 0
    %1436 = vmatprep.subr.bf16.mxu0 0
    %1437 = vmatpush1.bf16.msra.mxu0 0
    %1438 = vmatprep.subr.bf16.mxu0 0
    %1439 = vmatpush1.bf16.msra.mxu0 0
    %1440 = vmatprep.subr.bf16.mxu0 0
    %1441 = vmatpush1.bf16.msra.mxu0 0
    %1442 = vmatprep.subr.bf16.mxu0 0
    %1443 = vmatpush1.bf16.msra.mxu0 0
    %1444 = vmatprep.mubr.bf16.mxu0 0
    %1445 = vmatmul.mubr.bf16.gmra.mrb[0].mxu0 %v87
    %v1446 = vpop.f32.mrb[0].mxu0
    %v1447 = vadd.f32 0.0, %v1446
    %v1448 = vpop.f32.mrb[0].mxu0
    %v1449 = vadd.f32 0.0, %v1448
    %v1450 = vpop.f32.mrb[0].mxu0
    %v1451 = vpop.f32.mrb[0].mxu0
    %1452 = vdwg.mxu0
    %1453 = vmatprep.subr.bf16.mxu0 0
    %1454 = vmatpush1.bf16.msra.mxu0 %v1410
    %1455 = vmatprep.subr.bf16.mxu0 0
    %1456 = vmatpush1.bf16.msra.mxu0 0
    %1457 = vmatprep.subr.bf16.mxu0 0
    %1458 = vmatpush1.bf16.msra.mxu0 0
    %1459 = vmatprep.subr.bf16.mxu0 0
    %1460 = vmatpush1.bf16.msra.mxu0 0
    %1461 = vmatprep.subr.bf16.mxu0 0
    %1462 = vmatpush1.bf16.msra.mxu0 0
    %1463 = vmatprep.subr.bf16.mxu0 0
    %1464 = vmatpush1.bf16.msra.mxu0 0
    %1465 = vmatprep.subr.bf16.mxu0 0
    %1466 = vmatpush1.bf16.msra.mxu0 0
    %1467 = vmatprep.subr.bf16.mxu0 0
    %1468 = vmatpush1.bf16.msra.mxu0 0
    %1469 = vmatprep.subr.bf16.mxu0 0
    %1470 = vmatpush1.bf16.msra.mxu0 0
    %1471 = vmatprep.subr.bf16.mxu0 0
    %1472 = vmatpush1.bf16.msra.mxu0 0
    %1473 = vmatprep.subr.bf16.mxu0 0
    %1474 = vmatpush1.bf16.msra.mxu0 0
    %1475 = vmatprep.subr.bf16.mxu0 0
    %1476 = vmatpush1.bf16.msra.mxu0 0
    %1477 = vmatprep.subr.bf16.mxu0 0
    %1478 = vmatpush1.bf16.msra.mxu0 0
    %1479 = vmatprep.subr.bf16.mxu0 0
    %1480 = vmatpush1.bf16.msra.mxu0 0
    %1481 = vmatprep.subr.bf16.mxu0 0
    %1482 = vmatpush1.bf16.msra.mxu0 0
    %1483 = vmatprep.subr.bf16.mxu0 0
    %1484 = vmatpush1.bf16.msra.mxu0 0
    %1485 = vmatprep.mubr.bf16.mxu0 0
    %1486 = vmatmul.mubr.bf16.gmra.mrb[0].mxu0 %v87
    %v1487 = vpop.f32.mrb[0].mxu0
    %v1488 = vadd.f32 0.0, %v1487
    %v1489 = vpop.f32.mrb[0].mxu0
    %v1490 = vpop.f32.mrb[0].mxu0
    %v1491 = vpop.f32.mrb[0].mxu0
    %1492 = vdwg.mxu0
    %v1497 = vunpack.c.l.b16 %v1388
    %v1498 = vunpack.c.h.b16 %v1388
    %v1499 = vunpack.c.l.b16 %v1389
    %v1500 = vunpack.c.l.b16 %v1390
    %v1501 = vunpack.c.h.b16 %v1390
    %v1502 = vunpack.c.l.b16 %v1391
    %v1503 = vpack.c.b16 %v1500, %v1497
    %v1504 = vpack.c.b16 %v1501, %v1498
    %v1505 = vpack.c.b16 %v1502, %v1499
    %v1507 = vsel %vm200, %v1503, 0
    %v1510 = vsel %vm200, %v1504, 0
    %v1513 = vsel %vm200, %v1505, 0
    %1515 = vmatprep.subr.bf16.mxu0 %v1510
    %1516 = vmatpush1.bf16.msra.mxu0 %v1507
    %1517 = vmatprep.subr.bf16.mxu0 0
    %1518 = vmatpush1.bf16.msra.mxu0 0
    %1519 = vmatprep.subr.bf16.mxu0 0
    %1520 = vmatpush1.bf16.msra.mxu0 0
    %1521 = vmatprep.subr.bf16.mxu0 0
    %1522 = vmatpush1.bf16.msra.mxu0 0
    %1523 = vmatprep.subr.bf16.mxu0 0
    %1524 = vmatpush1.bf16.msra.mxu0 0
    %1525 = vmatprep.subr.bf16.mxu0 0
    %1526 = vmatpush1.bf16.msra.mxu0 0
    %1527 = vmatprep.subr.bf16.mxu0 0
    %1528 = vmatpush1.bf16.msra.mxu0 0
    %1529 = vmatprep.subr.bf16.mxu0 0
    %1530 = vmatpush1.bf16.msra.mxu0 0
    %1531 = vmatprep.subr.bf16.mxu0 0
    %1532 = vmatpush1.bf16.msra.mxu0 0
    %1533 = vmatprep.subr.bf16.mxu0 0
    %1534 = vmatpush1.bf16.msra.mxu0 0
    %1535 = vmatprep.subr.bf16.mxu0 0
    %1536 = vmatpush1.bf16.msra.mxu0 0
    %1537 = vmatprep.subr.bf16.mxu0 0
    %1538 = vmatpush1.bf16.msra.mxu0 0
    %1539 = vmatprep.subr.bf16.mxu0 0
    %1540 = vmatpush1.bf16.msra.mxu0 0
    %1541 = vmatprep.subr.bf16.mxu0 0
    %1542 = vmatpush1.bf16.msra.mxu0 0
    %1543 = vmatprep.subr.bf16.mxu0 0
    %1544 = vmatpush1.bf16.msra.mxu0 0
    %1545 = vmatprep.subr.bf16.mxu0 0
    %1546 = vmatpush1.bf16.msra.mxu0 0
    %1547 = vmatprep.mubr.bf16.mxu0 0
    %1548 = vmatmul.mubr.bf16.gmra.mrb[0].mxu0 %v198
    %v1549 = vpop.f32.mrb[0].mxu0
    %v1550 = vadd.f32 %v1447, %v1549
    %v1551 = vpop.f32.mrb[0].mxu0
    %v1552 = vadd.f32 %v1449, %v1551
    %v1553 = vpop.f32.mrb[0].mxu0
    %v1554 = vpop.f32.mrb[0].mxu0
    %1555 = vdwg.mxu0
    %1556 = vmatprep.subr.bf16.mxu0 0
    %1557 = vmatpush1.bf16.msra.mxu0 %v1513
    %1558 = vmatprep.subr.bf16.mxu0 0
    %1559 = vmatpush1.bf16.msra.mxu0 0
    %1560 = vmatprep.subr.bf16.mxu0 0
    %1561 = vmatpush1.bf16.msra.mxu0 0
    %1562 = vmatprep.subr.bf16.mxu0 0
    %1563 = vmatpush1.bf16.msra.mxu0 0
    %1564 = vmatprep.subr.bf16.mxu0 0
    %1565 = vmatpush1.bf16.msra.mxu0 0
    %1566 = vmatprep.subr.bf16.mxu0 0
    %1567 = vmatpush1.bf16.msra.mxu0 0
    %1568 = vmatprep.subr.bf16.mxu0 0
    %1569 = vmatpush1.bf16.msra.mxu0 0
    %1570 = vmatprep.subr.bf16.mxu0 0
    %1571 = vmatpush1.bf16.msra.mxu0 0
    %1572 = vmatprep.subr.bf16.mxu0 0
    %1573 = vmatpush1.bf16.msra.mxu0 0
    %1574 = vmatprep.subr.bf16.mxu0 0
    %1575 = vmatpush1.bf16.msra.mxu0 0
    %1576 = vmatprep.subr.bf16.mxu0 0
    %1577 = vmatpush1.bf16.msra.mxu0 0
    %1578 = vmatprep.subr.bf16.mxu0 0
    %1579 = vmatpush1.bf16.msra.mxu0 0
    %1580 = vmatprep.subr.bf16.mxu0 0
    %1581 = vmatpush1.bf16.msra.mxu0 0
    %1582 = vmatprep.subr.bf16.mxu0 0
    %1583 = vmatpush1.bf16.msra.mxu0 0
    %1584 = vmatprep.subr.bf16.mxu0 0
    %1585 = vmatpush1.bf16.msra.mxu0 0
    %1586 = vmatprep.subr.bf16.mxu0 0
    %1587 = vmatpush1.bf16.msra.mxu0 0
    %1588 = vmatprep.mubr.bf16.mxu0 0
    %1589 = vmatmul.mubr.bf16.gmra.mrb[0].mxu0 %v198
    %v1590 = vpop.f32.mrb[0].mxu0
    %v1591 = vadd.f32 %v1488, %v1590
    %v1592 = vpop.f32.mrb[0].mxu0
    %v1593 = vpop.f32.mrb[0].mxu0
    %v1594 = vpop.f32.mrb[0].mxu0
    %1595 = vdwg.mxu0
    %s1596 = scalar_lea.vmem %s5, 12
    %v1597 = vld [vmem:[%s1596] sm:$0x77]
    %v1598 = vld [vmem:[%s1596 + $0x8] sm:$0x7]
    %v1601 = vunpack.c.l.b16 %v1597
    %v1602 = vunpack.c.h.b16 %v1597
    %v1603 = vunpack.c.l.b16 %v1598
    %v1604 = vpack.c.b16 %v1601, %v1601
    %v1605 = vpack.c.b16 %v1602, %v1602
    %v1606 = vpack.c.b16 %v1603, %v1603
    %v1608 = vand.u32 %v1604, %v92
    %v1611 = vand.u32 %v1605, %v92
    %v1614 = vand.u32 %v1606, %v92
    %1616 = vmatprep.subr.bf16.mxu0 %v1611
    %1617 = vmatpush1.bf16.msra.mxu0 %v1608
    %1618 = vmatprep.subr.bf16.mxu0 0
    %1619 = vmatpush1.bf16.msra.mxu0 0
    %1620 = vmatprep.subr.bf16.mxu0 0
    %1621 = vmatpush1.bf16.msra.mxu0 0
    %1622 = vmatprep.subr.bf16.mxu0 0
    %1623 = vmatpush1.bf16.msra.mxu0 0
    %1624 = vmatprep.subr.bf16.mxu0 0
    %1625 = vmatpush1.bf16.msra.mxu0 0
    %1626 = vmatprep.subr.bf16.mxu0 0
    %1627 = vmatpush1.bf16.msra.mxu0 0
    %1628 = vmatprep.subr.bf16.mxu0 0
    %1629 = vmatpush1.bf16.msra.mxu0 0
    %1630 = vmatprep.subr.bf16.mxu0 0
    %1631 = vmatpush1.bf16.msra.mxu0 0
    %1632 = vmatprep.subr.bf16.mxu0 0
    %1633 = vmatpush1.bf16.msra.mxu0 0
    %1634 = vmatprep.subr.bf16.mxu0 0
    %1635 = vmatpush1.bf16.msra.mxu0 0
    %1636 = vmatprep.subr.bf16.mxu0 0
    %1637 = vmatpush1.bf16.msra.mxu0 0
    %1638 = vmatprep.subr.bf16.mxu0 0
    %1639 = vmatpush1.bf16.msra.mxu0 0
    %1640 = vmatprep.subr.bf16.mxu0 0
    %1641 = vmatpush1.bf16.msra.mxu0 0
    %1642 = vmatprep.subr.bf16.mxu0 0
    %1643 = vmatpush1.bf16.msra.mxu0 0
    %1644 = vmatprep.subr.bf16.mxu0 0
    %1645 = vmatpush1.bf16.msra.mxu0 0
    %1646 = vmatprep.subr.bf16.mxu0 0
    %1647 = vmatpush1.bf16.msra.mxu0 0
    %1648 = vmatprep.mubr.bf16.mxu0 0
    %1649 = vmatmul.mubr.bf16.gmra.mrb[0].mxu0 %v302
    %v1650 = vpop.f32.mrb[0].mxu0
    %v1651 = vadd.f32 0.0, %v1650
    %v1652 = vpop.f32.mrb[0].mxu0
    %v1653 = vadd.f32 0.0, %v1652
    %v1654 = vpop.f32.mrb[0].mxu0
    %v1655 = vpop.f32.mrb[0].mxu0
    %1656 = vdwg.mxu0
    %1657 = vmatprep.subr.bf16.mxu0 0
    %1658 = vmatpush1.bf16.msra.mxu0 %v1614
    %1659 = vmatprep.subr.bf16.mxu0 0
    %1660 = vmatpush1.bf16.msra.mxu0 0
    %1661 = vmatprep.subr.bf16.mxu0 0
    %1662 = vmatpush1.bf16.msra.mxu0 0
    %1663 = vmatprep.subr.bf16.mxu0 0
    %1664 = vmatpush1.bf16.msra.mxu0 0
    %1665 = vmatprep.subr.bf16.mxu0 0
    %1666 = vmatpush1.bf16.msra.mxu0 0
    %1667 = vmatprep.subr.bf16.mxu0 0
    %1668 = vmatpush1.bf16.msra.mxu0 0
    %1669 = vmatprep.subr.bf16.mxu0 0
    %1670 = vmatpush1.bf16.msra.mxu0 0
    %1671 = vmatprep.subr.bf16.mxu0 0
    %1672 = vmatpush1.bf16.msra.mxu0 0
    %1673 = vmatprep.subr.bf16.mxu0 0
    %1674 = vmatpush1.bf16.msra.mxu0 0
    %1675 = vmatprep.subr.bf16.mxu0 0
    %1676 = vmatpush1.bf16.msra.mxu0 0
    %1677 = vmatprep.subr.bf16.mxu0 0
    %1678 = vmatpush1.bf16.msra.mxu0 0
    %1679 = vmatprep.subr.bf16.mxu0 0
    %1680 = vmatpush1.bf16.msra.mxu0 0
    %1681 = vmatprep.subr.bf16.mxu0 0
    %1682 = vmatpush1.bf16.msra.mxu0 0
    %1683 = vmatprep.subr.bf16.mxu0 0
    %1684 = vmatpush1.bf16.msra.mxu0 0
    %1685 = vmatprep.subr.bf16.mxu0 0
    %1686 = vmatpush1.bf16.msra.mxu0 0
    %1687 = vmatprep.subr.bf16.mxu0 0
    %1688 = vmatpush1.bf16.msra.mxu0 0
    %1689 = vmatprep.mubr.bf16.mxu0 0
    %1690 = vmatmul.mubr.bf16.gmra.mrb[0].mxu0 %v302
    %v1691 = vpop.f32.mrb[0].mxu0
    %v1692 = vadd.f32 0.0, %v1691
    %v1693 = vpop.f32.mrb[0].mxu0
    %v1694 = vpop.f32.mrb[0].mxu0
    %v1695 = vpop.f32.mrb[0].mxu0
    %1696 = vdwg.mxu0
    %v1697 = vadd.f32 %v1550, %v1651
    %v1698 = vadd.f32 %v1552, %v1653
    %v1699 = vadd.f32 %v1591, %v1692
    %v1701 = vlaneseq
    %v1702 = vshrl.u32 %v1701, 7
    %v1703 = vsub.s32 0, %v1702
    %v1704 = vrot.slane %v1386, %v1703
    %v1705 = vlaneseq
    %v1706 = vshrl.u32 %v1705, 7
    %v1707 = vsub.s32 2, %v1706
    %v1708 = vrot.slane %v1386, %v1707
    %v1709 = vlaneseq
    %v1710 = vshrl.u32 %v1709, 7
    %v1711 = vsub.s32 4, %v1710
    %v1712 = vrot.slane %v1386, %v1711
    %v1716 = vlaneseq
    %v1717 = vshrl.u32 %v1716, 7
    %v1718 = vsub.s32 0, %v1717
    %v1719 = vrot.slane %v1704, %v1718
    %v1720 = vlaneseq
    %v1721 = vshrl.u32 %v1720, 7
    %v1722 = vsub.s32 0, %v1721
    %v1723 = vrot.slane %v1708, %v1722
    %v1724 = vlaneseq
    %v1725 = vshrl.u32 %v1724, 7
    %v1726 = vsub.s32 0, %v1725
    %v1727 = vrot.slane %v1712, %v1726
    %v1728 = vadd.f32 %v1697, %v1719
    %v1729 = vadd.f32 %v1698, %v1723
    %v1730 = vadd.f32 %v1699, %v1727
    %v1731 = vmax.f32 %v1728, 0.0
    %v1732 = vmax.f32 %v1729, 0.0
    %v1733 = vmax.f32 %v1730, 0.0
    %v1734 = vpack.c.bf16 %v1731, %v1731
    %v1735 = vpack.c.bf16 %v1732, %v1732
    %v1736 = vpack.c.bf16 %v1733, %v1733
    %s1737 = scalar_lea.vmem [#allocation2], 576
    %v1738 = vld [vmem:[%s1737] sm:$0xff]
    %v1739 = vld [vmem:[%s1737 + $0x8] sm:$0xf]
    %v1740 = vld [vmem:[%s1737 + $0xc] sm:$0xff]
    %v1741 = vld [vmem:[%s1737 + $0x14] sm:$0xf]
    %v1742 = vld [vmem:[%s1737 + $0x18] sm:$0xff]
    %v1743 = vld [vmem:[%s1737 + $0x20] sm:$0xf]
    %v1744 = vld [vmem:[%s1737 + $0x24] sm:$0xff]
    %v1745 = vld [vmem:[%s1737 + $0x2c] sm:$0xf]
    %v1746 = vld [vmem:[%s1737 + $0x30] sm:$0xff]
    %v1747 = vld [vmem:[%s1737 + $0x38] sm:$0xf]
    %v1748 = vld [vmem:[%s1737 + $0x3c] sm:$0xff]
    %v1749 = vld [vmem:[%s1737 + $0x44] sm:$0xf]
    %v1750 = vld [vmem:[%s1737 + $0x48] sm:$0xff]
    %v1751 = vld [vmem:[%s1737 + $0x50] sm:$0xf]
    %v1752 = vld [vmem:[%s1737 + $0x54] sm:$0xff]
    %v1753 = vld [vmem:[%s1737 + $0x5c] sm:$0xf]
    %v1754 = vld [vmem:[%s1737 + $0x60] sm:$0xff]
    %v1755 = vld [vmem:[%s1737 + $0x68] sm:$0xf]
    %v1756 = vld [vmem:[%s1737 + $0x6c] sm:$0xff]
    %v1757 = vld [vmem:[%s1737 + $0x74] sm:$0xf]
    %v1758 = vld [vmem:[%s1737 + $0x78] sm:$0xff]
    %v1759 = vld [vmem:[%s1737 + $0x80] sm:$0xf]
    %v1760 = vld [vmem:[%s1737 + $0x84] sm:$0xff]
    %v1761 = vld [vmem:[%s1737 + $0x8c] sm:$0xf]
    %v1762 = vld [vmem:[%s1737 + $0x90] sm:$0xff]
    %v1763 = vld [vmem:[%s1737 + $0x98] sm:$0xf]
    %v1764 = vld [vmem:[%s1737 + $0x9c] sm:$0xff]
    %v1765 = vld [vmem:[%s1737 + $0xa4] sm:$0xf]
    %v1766 = vld [vmem:[%s1737 + $0xa8] sm:$0xff]
    %v1767 = vld [vmem:[%s1737 + $0xb0] sm:$0xf]
    %v1768 = vld [vmem:[%s1737 + $0xb4] sm:$0xff]
    %v1769 = vld [vmem:[%s1737 + $0xbc] sm:$0xf]
    %v1770 = vld [vmem:[%s1737 + $0xc0] sm:$0xff]
    %v1771 = vld [vmem:[%s1737 + $0xc8] sm:$0xf]
    %v1772 = vld [vmem:[%s1737 + $0xcc] sm:$0xff]
    %v1773 = vld [vmem:[%s1737 + $0xd4] sm:$0xf]
    %v1774 = vld [vmem:[%s1737 + $0xd8] sm:$0xff]
    %v1775 = vld [vmem:[%s1737 + $0xe0] sm:$0xf]
    %v1776 = vld [vmem:[%s1737 + $0xe4] sm:$0xff]
    %v1777 = vld [vmem:[%s1737 + $0xec] sm:$0xf]
    %v1778 = vld [vmem:[%s1737 + $0xf0] sm:$0xff]
    %v1779 = vld [vmem:[%s1737 + $0xf8] sm:$0xf]
    %v1780 = vld [vmem:[%s1737 + $0xfc] sm:$0xff]
    %v1781 = vld [vmem:[%s1737 + $0x104] sm:$0xf]
    %v1782 = vld [vmem:[%s1737 + $0x108] sm:$0xff]
    %v1783 = vld [vmem:[%s1737 + $0x110] sm:$0xf]
    %v1784 = vld [vmem:[%s1737 + $0x114] sm:$0xff]
    %v1785 = vld [vmem:[%s1737 + $0x11c] sm:$0xf]
    %v1786 = vld [vmem:[%s1737 + $0x120] sm:$0xff]
    %v1787 = vld [vmem:[%s1737 + $0x128] sm:$0xf]
    %v1788 = vld [vmem:[%s1737 + $0x12c] sm:$0xff]
    %v1789 = vld [vmem:[%s1737 + $0x134] sm:$0xf]
    %v1790 = vld [vmem:[%s1737 + $0x138] sm:$0xff]
    %v1791 = vld [vmem:[%s1737 + $0x140] sm:$0xf]
    %v1792 = vld [vmem:[%s1737 + $0x144] sm:$0xff]
    %v1793 = vld [vmem:[%s1737 + $0x14c] sm:$0xf]
    %v1794 = vld [vmem:[%s1737 + $0x150] sm:$0xff]
    %v1795 = vld [vmem:[%s1737 + $0x158] sm:$0xf]
    %v1796 = vld [vmem:[%s1737 + $0x15c] sm:$0xff]
    %v1797 = vld [vmem:[%s1737 + $0x164] sm:$0xf]
    %v1798 = vld [vmem:[%s1737 + $0x168] sm:$0xff]
    %v1799 = vld [vmem:[%s1737 + $0x170] sm:$0xf]
    %v1800 = vld [vmem:[%s1737 + $0x174] sm:$0xff]
    %v1801 = vld [vmem:[%s1737 + $0x17c] sm:$0xf]
    %v1802 = vld [vmem:[%s1737 + $0x180] sm:$0xff]
    %v1803 = vld [vmem:[%s1737 + $0x188] sm:$0xf]
    %v1804 = vld [vmem:[%s1737 + $0x18c] sm:$0xff]
    %v1805 = vld [vmem:[%s1737 + $0x194] sm:$0xf]
    %v1806 = vld [vmem:[%s1737 + $0x198] sm:$0xff]
    %v1807 = vld [vmem:[%s1737 + $0x1a0] sm:$0xf]
    %v1808 = vld [vmem:[%s1737 + $0x1a4] sm:$0xff]
    %v1809 = vld [vmem:[%s1737 + $0x1ac] sm:$0xf]
    %v1810 = vld [vmem:[%s1737 + $0x1b0] sm:$0xff]
    %v1811 = vld [vmem:[%s1737 + $0x1b8] sm:$0xf]
    %v1812 = vld [vmem:[%s1737 + $0x1bc] sm:$0xff]
    %v1813 = vld [vmem:[%s1737 + $0x1c4] sm:$0xf]
    %v1814 = vld [vmem:[%s1737 + $0x1c8] sm:$0xff]
    %v1815 = vld [vmem:[%s1737 + $0x1d0] sm:$0xf]
    %v1816 = vld [vmem:[%s1737 + $0x1d4] sm:$0xff]
    %v1817 = vld [vmem:[%s1737 + $0x1dc] sm:$0xf]
    %v1818 = vld [vmem:[%s1737 + $0x1e0] sm:$0xff]
    %v1819 = vld [vmem:[%s1737 + $0x1e8] sm:$0xf]
    %v1820 = vld [vmem:[%s1737 + $0x1ec] sm:$0xff]
    %v1821 = vld [vmem:[%s1737 + $0x1f4] sm:$0xf]
    %v1822 = vld [vmem:[%s1737 + $0x1f8] sm:$0xff]
    %v1823 = vld [vmem:[%s1737 + $0x200] sm:$0xf]
    %v1824 = vld [vmem:[%s1737 + $0x204] sm:$0xff]
    %v1825 = vld [vmem:[%s1737 + $0x20c] sm:$0xf]
    %v1826 = vld [vmem:[%s1737 + $0x210] sm:$0xff]
    %v1827 = vld [vmem:[%s1737 + $0x218] sm:$0xf]
    %v1828 = vld [vmem:[%s1737 + $0x21c] sm:$0xff]
    %v1829 = vld [vmem:[%s1737 + $0x224] sm:$0xf]
    %v1830 = vld [vmem:[%s1737 + $0x228] sm:$0xff]
    %v1831 = vld [vmem:[%s1737 + $0x230] sm:$0xf]
    %v1832 = vld [vmem:[%s1737 + $0x234] sm:$0xff]
    %v1833 = vld [vmem:[%s1737 + $0x23c] sm:$0xf]
    %v1834 = vlaneseq
    %v1835 = vshrl.u32 %v1834, 7
    %v1836 = vsub.s32 1, %v1835
    %v1837 = vrot.slane %v1386, %v1836
    %v1838 = vlaneseq
    %v1839 = vshrl.u32 %v1838, 7
    %v1840 = vsub.s32 3, %v1839
    %v1841 = vrot.slane %v1386, %v1840
    %v1842 = vlaneseq
    %v1843 = vshrl.u32 %v1842, 7
    %v1844 = vsub.s32 5, %v1843
    %v1845 = vrot.slane %v1386, %v1844
    %v1849 = vlaneseq
    %v1850 = vshrl.u32 %v1849, 7
    %v1851 = vsub.s32 1, %v1850
    %v1852 = vrot.slane %v1837, %v1851
    %v1853 = vlaneseq
    %v1854 = vshrl.u32 %v1853, 7
    %v1855 = vsub.s32 1, %v1854
    %v1856 = vrot.slane %v1841, %v1855
    %v1857 = vlaneseq
    %v1858 = vshrl.u32 %v1857, 7
    %v1859 = vsub.s32 1, %v1858
    %v1860 = vrot.slane %v1845, %v1859
    %v1957 = vunpack.c.l.b16 %v1738
    %v1958 = vunpack.c.h.b16 %v1738
    %v1959 = vunpack.c.l.b16 %v1739
    %v1960 = vunpack.c.l.b16 %v1740
    %v1961 = vunpack.c.h.b16 %v1740
    %v1962 = vunpack.c.l.b16 %v1741
    %v1963 = vunpack.c.l.b16 %v1742
    %v1964 = vunpack.c.h.b16 %v1742
    %v1965 = vunpack.c.l.b16 %v1743
    %v1966 = vunpack.c.l.b16 %v1744
    %v1967 = vunpack.c.h.b16 %v1744
    %v1968 = vunpack.c.l.b16 %v1745
    %v1969 = vunpack.c.l.b16 %v1746
    %v1970 = vunpack.c.h.b16 %v1746
    %v1971 = vunpack.c.l.b16 %v1747
    %v1972 = vunpack.c.l.b16 %v1748
    %v1973 = vunpack.c.h.b16 %v1748
    %v1974 = vunpack.c.l.b16 %v1749
    %v1975 = vunpack.c.l.b16 %v1750
    %v1976 = vunpack.c.h.b16 %v1750
    %v1977 = vunpack.c.l.b16 %v1751
    %v1978 = vunpack.c.l.b16 %v1752
    %v1979 = vunpack.c.h.b16 %v1752
    %v1980 = vunpack.c.l.b16 %v1753
    %v1981 = vunpack.c.l.b16 %v1754
    %v1982 = vunpack.c.h.b16 %v1754
    %v1983 = vunpack.c.l.b16 %v1755
    %v1984 = vunpack.c.l.b16 %v1756
    %v1985 = vunpack.c.h.b16 %v1756
    %v1986 = vunpack.c.l.b16 %v1757
    %v1987 = vunpack.c.l.b16 %v1758
    %v1988 = vunpack.c.h.b16 %v1758
    %v1989 = vunpack.c.l.b16 %v1759
    %v1990 = vunpack.c.l.b16 %v1760
    %v1991 = vunpack.c.h.b16 %v1760
    %v1992 = vunpack.c.l.b16 %v1761
    %v1993 = vunpack.c.l.b16 %v1762
    %v1994 = vunpack.c.h.b16 %v1762
    %v1995 = vunpack.c.l.b16 %v1763
    %v1996 = vunpack.c.l.b16 %v1764
    %v1997 = vunpack.c.h.b16 %v1764
    %v1998 = vunpack.c.l.b16 %v1765
    %v1999 = vunpack.c.l.b16 %v1766
    %v2000 = vunpack.c.h.b16 %v1766
    %v2001 = vunpack.c.l.b16 %v1767
    %v2002 = vunpack.c.l.b16 %v1768
    %v2003 = vunpack.c.h.b16 %v1768
    %v2004 = vunpack.c.l.b16 %v1769
    %v2005 = vunpack.c.l.b16 %v1770
    %v2006 = vunpack.c.h.b16 %v1770
    %v2007 = vunpack.c.l.b16 %v1771
    %v2008 = vunpack.c.l.b16 %v1772
    %v2009 = vunpack.c.h.b16 %v1772
    %v2010 = vunpack.c.l.b16 %v1773
    %v2011 = vunpack.c.l.b16 %v1774
    %v2012 = vunpack.c.h.b16 %v1774
    %v2013 = vunpack.c.l.b16 %v1775
    %v2014 = vunpack.c.l.b16 %v1776
    %v2015 = vunpack.c.h.b16 %v1776
    %v2016 = vunpack.c.l.b16 %v1777
    %v2017 = vunpack.c.l.b16 %v1778
    %v2018 = vunpack.c.h.b16 %v1778
    %v2019 = vunpack.c.l.b16 %v1779
    %v2020 = vunpack.c.l.b16 %v1780
    %v2021 = vunpack.c.h.b16 %v1780
    %v2022 = vunpack.c.l.b16 %v1781
    %v2023 = vunpack.c.l.b16 %v1782
    %v2024 = vunpack.c.h.b16 %v1782
    %v2025 = vunpack.c.l.b16 %v1783
    %v2026 = vunpack.c.l.b16 %v1784
    %v2027 = vunpack.c.h.b16 %v1784
    %v2028 = vunpack.c.l.b16 %v1785
    %v2029 = vunpack.c.l.b16 %v1786
    %v2030 = vunpack.c.h.b16 %v1786
    %v2031 = vunpack.c.l.b16 %v1787
    %v2032 = vunpack.c.l.b16 %v1788
    %v2033 = vunpack.c.h.b16 %v1788
    %v2034 = vunpack.c.l.b16 %v1789
    %v2035 = vunpack.c.l.b16 %v1790
    %v2036 = vunpack.c.h.b16 %v1790
    %v2037 = vunpack.c.l.b16 %v1791
    %v2038 = vunpack.c.l.b16 %v1792
    %v2039 = vunpack.c.h.b16 %v1792
    %v2040 = vunpack.c.l.b16 %v1793
    %v2041 = vunpack.c.l.b16 %v1794
    %v2042 = vunpack.c.h.b16 %v1794
    %v2043 = vunpack.c.l.b16 %v1795
    %v2044 = vunpack.c.l.b16 %v1796
    %v2045 = vunpack.c.h.b16 %v1796
    %v2046 = vunpack.c.l.b16 %v1797
    %v2047 = vunpack.c.l.b16 %v1798
    %v2048 = vunpack.c.h.b16 %v1798
    %v2049 = vunpack.c.l.b16 %v1799
    %v2050 = vunpack.c.l.b16 %v1800
    %v2051 = vunpack.c.h.b16 %v1800
    %v2052 = vunpack.c.l.b16 %v1801
    %v2053 = vunpack.c.l.b16 %v1802
    %v2054 = vunpack.c.h.b16 %v1802
    %v2055 = vunpack.c.l.b16 %v1803
    %v2056 = vunpack.c.l.b16 %v1804
    %v2057 = vunpack.c.h.b16 %v1804
    %v2058 = vunpack.c.l.b16 %v1805
    %v2059 = vunpack.c.l.b16 %v1806
    %v2060 = vunpack.c.h.b16 %v1806
    %v2061 = vunpack.c.l.b16 %v1807
    %v2062 = vunpack.c.l.b16 %v1808
    %v2063 = vunpack.c.h.b16 %v1808
    %v2064 = vunpack.c.l.b16 %v1809
    %v2065 = vunpack.c.l.b16 %v1810
    %v2066 = vunpack.c.h.b16 %v1810
    %v2067 = vunpack.c.l.b16 %v1811
    %v2068 = vunpack.c.l.b16 %v1812
    %v2069 = vunpack.c.h.b16 %v1812
    %v2070 = vunpack.c.l.b16 %v1813
    %v2071 = vunpack.c.l.b16 %v1814
    %v2072 = vunpack.c.h.b16 %v1814
    %v2073 = vunpack.c.l.b16 %v1815
    %v2074 = vunpack.c.l.b16 %v1816
    %v2075 = vunpack.c.h.b16 %v1816
    %v2076 = vunpack.c.l.b16 %v1817
    %v2077 = vunpack.c.l.b16 %v1818
    %v2078 = vunpack.c.h.b16 %v1818
    %v2079 = vunpack.c.l.b16 %v1819
    %v2080 = vunpack.c.l.b16 %v1820
    %v2081 = vunpack.c.h.b16 %v1820
    %v2082 = vunpack.c.l.b16 %v1821
    %v2083 = vunpack.c.l.b16 %v1822
    %v2084 = vunpack.c.h.b16 %v1822
    %v2085 = vunpack.c.l.b16 %v1823
    %v2086 = vunpack.c.l.b16 %v1824
    %v2087 = vunpack.c.h.b16 %v1824
    %v2088 = vunpack.c.l.b16 %v1825
    %v2089 = vunpack.c.l.b16 %v1826
    %v2090 = vunpack.c.h.b16 %v1826
    %v2091 = vunpack.c.l.b16 %v1827
    %v2092 = vunpack.c.l.b16 %v1828
    %v2093 = vunpack.c.h.b16 %v1828
    %v2094 = vunpack.c.l.b16 %v1829
    %v2095 = vunpack.c.l.b16 %v1830
    %v2096 = vunpack.c.h.b16 %v1830
    %v2097 = vunpack.c.l.b16 %v1831
    %v2098 = vunpack.c.l.b16 %v1832
    %v2099 = vunpack.c.h.b16 %v1832
    %v2100 = vunpack.c.l.b16 %v1833
    %v2101 = vpack.c.b16 %v1960, %v1957
    %v2102 = vpack.c.b16 %v1961, %v1958
    %v2103 = vpack.c.b16 %v1962, %v1959
    %v2104 = vpack.c.b16 %v1966, %v1963
    %v2105 = vpack.c.b16 %v1967, %v1964
    %v2106 = vpack.c.b16 %v1968, %v1965
    %v2107 = vpack.c.b16 %v1972, %v1969
    %v2108 = vpack.c.b16 %v1973, %v1970
    %v2109 = vpack.c.b16 %v1974, %v1971
    %v2110 = vpack.c.b16 %v1978, %v1975
    %v2111 = vpack.c.b16 %v1979, %v1976
    %v2112 = vpack.c.b16 %v1980, %v1977
    %v2113 = vpack.c.b16 %v1984, %v1981
    %v2114 = vpack.c.b16 %v1985, %v1982
    %v2115 = vpack.c.b16 %v1986, %v1983
    %v2116 = vpack.c.b16 %v1990, %v1987
    %v2117 = vpack.c.b16 %v1991, %v1988
    %v2118 = vpack.c.b16 %v1992, %v1989
    %v2119 = vpack.c.b16 %v1996, %v1993
    %v2120 = vpack.c.b16 %v1997, %v1994
    %v2121 = vpack.c.b16 %v1998, %v1995
    %v2122 = vpack.c.b16 %v2002, %v1999
    %v2123 = vpack.c.b16 %v2003, %v2000
    %v2124 = vpack.c.b16 %v2004, %v2001
    %v2125 = vpack.c.b16 %v2008, %v2005
    %v2126 = vpack.c.b16 %v2009, %v2006
    %v2127 = vpack.c.b16 %v2010, %v2007
    %v2128 = vpack.c.b16 %v2014, %v2011
    %v2129 = vpack.c.b16 %v2015, %v2012
    %v2130 = vpack.c.b16 %v2016, %v2013
    %v2131 = vpack.c.b16 %v2020, %v2017
    %v2132 = vpack.c.b16 %v2021, %v2018
    %v2133 = vpack.c.b16 %v2022, %v2019
    %v2134 = vpack.c.b16 %v2026, %v2023
    %v2135 = vpack.c.b16 %v2027, %v2024
    %v2136 = vpack.c.b16 %v2028, %v2025
    %v2137 = vpack.c.b16 %v2032, %v2029
    %v2138 = vpack.c.b16 %v2033, %v2030
    %v2139 = vpack.c.b16 %v2034, %v2031
    %v2140 = vpack.c.b16 %v2038, %v2035
    %v2141 = vpack.c.b16 %v2039, %v2036
    %v2142 = vpack.c.b16 %v2040, %v2037
    %v2143 = vpack.c.b16 %v2044, %v2041
    %v2144 = vpack.c.b16 %v2045, %v2042
    %v2145 = vpack.c.b16 %v2046, %v2043
    %v2146 = vpack.c.b16 %v2050, %v2047
    %v2147 = vpack.c.b16 %v2051, %v2048
    %v2148 = vpack.c.b16 %v2052, %v2049
    %v2149 = vpack.c.b16 %v2056, %v2053
    %v2150 = vpack.c.b16 %v2057, %v2054
    %v2151 = vpack.c.b16 %v2058, %v2055
    %v2152 = vpack.c.b16 %v2062, %v2059
    %v2153 = vpack.c.b16 %v2063, %v2060
    %v2154 = vpack.c.b16 %v2064, %v2061
    %v2155 = vpack.c.b16 %v2068, %v2065
    %v2156 = vpack.c.b16 %v2069, %v2066
    %v2157 = vpack.c.b16 %v2070, %v2067
    %v2158 = vpack.c.b16 %v2074, %v2071
    %v2159 = vpack.c.b16 %v2075, %v2072
    %v2160 = vpack.c.b16 %v2076, %v2073
    %v2161 = vpack.c.b16 %v2080, %v2077
    %v2162 = vpack.c.b16 %v2081, %v2078
    %v2163 = vpack.c.b16 %v2082, %v2079
    %v2164 = vpack.c.b16 %v2086, %v2083
    %v2165 = vpack.c.b16 %v2087, %v2084
    %v2166 = vpack.c.b16 %v2088, %v2085
    %v2167 = vpack.c.b16 %v2092, %v2089
    %v2168 = vpack.c.b16 %v2093, %v2090
    %v2169 = vpack.c.b16 %v2094, %v2091
    %v2170 = vpack.c.b16 %v2098, %v2095
    %v2171 = vpack.c.b16 %v2099, %v2096
    %v2172 = vpack.c.b16 %v2100, %v2097
    %2245 = vmatprep.subr.bf16.mxu0 %v2102
    %2246 = vmatpush1.bf16.msra.mxu0 %v2101
    %2247 = vmatprep.subr.bf16.mxu0 %v2105
    %2248 = vmatpush1.bf16.msra.mxu0 %v2104
    %2249 = vmatprep.subr.bf16.mxu0 %v2108
    %2250 = vmatpush1.bf16.msra.mxu0 %v2107
    %2251 = vmatprep.subr.bf16.mxu0 %v2111
    %2252 = vmatpush1.bf16.msra.mxu0 %v2110
    %2253 = vmatprep.subr.bf16.mxu0 %v2114
    %2254 = vmatpush1.bf16.msra.mxu0 %v2113
    %2255 = vmatprep.subr.bf16.mxu0 %v2117
    %2256 = vmatpush1.bf16.msra.mxu0 %v2116
    %2257 = vmatprep.subr.bf16.mxu0 %v2120
    %2258 = vmatpush1.bf16.msra.mxu0 %v2119
    %2259 = vmatprep.subr.bf16.mxu0 %v2123
    %2260 = vmatpush1.bf16.msra.mxu0 %v2122
    %2261 = vmatprep.subr.bf16.mxu0 %v2126
    %2262 = vmatpush1.bf16.msra.mxu0 %v2125
    %2263 = vmatprep.subr.bf16.mxu0 %v2129
    %2264 = vmatpush1.bf16.msra.mxu0 %v2128
    %2265 = vmatprep.subr.bf16.mxu0 %v2132
    %2266 = vmatpush1.bf16.msra.mxu0 %v2131
    %2267 = vmatprep.subr.bf16.mxu0 %v2135
    %2268 = vmatpush1.bf16.msra.mxu0 %v2134
    %2269 = vmatprep.subr.bf16.mxu0 %v2138
    %2270 = vmatpush1.bf16.msra.mxu0 %v2137
    %2271 = vmatprep.subr.bf16.mxu0 %v2141
    %2272 = vmatpush1.bf16.msra.mxu0 %v2140
    %2273 = vmatprep.subr.bf16.mxu0 %v2144
    %2274 = vmatpush1.bf16.msra.mxu0 %v2143
    %2275 = vmatprep.subr.bf16.mxu0 %v2147
    %2276 = vmatpush1.bf16.msra.mxu0 %v2146
    %2277 = vmatprep.mubr.bf16.mxu0 %v1735
    %2278 = vmatmul.mubr.bf16.gmra.mrb[0].mxu0 %v1734
    %v2279 = vpop.f32.mrb[0].mxu0
    %v2280 = vadd.f32 %v1852, %v2279
    %v2281 = vpop.f32.mrb[0].mxu0
    %v2282 = vadd.f32 %v1856, %v2281
    %v2283 = vpop.f32.mrb[0].mxu0
    %v2284 = vpop.f32.mrb[0].mxu0
    %2285 = vdwg.mxu0
    %2286 = vmatprep.subr.bf16.mxu0 %v2150
    %2287 = vmatpush1.bf16.msra.mxu0 %v2149
    %2288 = vmatprep.subr.bf16.mxu0 %v2153
    %2289 = vmatpush1.bf16.msra.mxu0 %v2152
    %2290 = vmatprep.subr.bf16.mxu0 %v2156
    %2291 = vmatpush1.bf16.msra.mxu0 %v2155
    %2292 = vmatprep.subr.bf16.mxu0 %v2159
    %2293 = vmatpush1.bf16.msra.mxu0 %v2158
    %2294 = vmatprep.subr.bf16.mxu0 %v2162
    %2295 = vmatpush1.bf16.msra.mxu0 %v2161
    %2296 = vmatprep.subr.bf16.mxu0 %v2165
    %2297 = vmatpush1.bf16.msra.mxu0 %v2164
    %2298 = vmatprep.subr.bf16.mxu0 %v2168
    %2299 = vmatpush1.bf16.msra.mxu0 %v2167
    %2300 = vmatprep.subr.bf16.mxu0 %v2171
    %2301 = vmatpush1.bf16.msra.mxu0 %v2170
    %2302 = vmatprep.subr.bf16.mxu0 0
    %2303 = vmatpush1.bf16.msra.mxu0 0
    %2304 = vmatprep.subr.bf16.mxu0 0
    %2305 = vmatpush1.bf16.msra.mxu0 0
    %2306 = vmatprep.subr.bf16.mxu0 0
    %2307 = vmatpush1.bf16.msra.mxu0 0
    %2308 = vmatprep.subr.bf16.mxu0 0
    %2309 = vmatpush1.bf16.msra.mxu0 0
    %2310 = vmatprep.subr.bf16.mxu0 0
    %2311 = vmatpush1.bf16.msra.mxu0 0
    %2312 = vmatprep.subr.bf16.mxu0 0
    %2313 = vmatpush1.bf16.msra.mxu0 0
    %2314 = vmatprep.subr.bf16.mxu0 0
    %2315 = vmatpush1.bf16.msra.mxu0 0
    %2316 = vmatprep.subr.bf16.mxu0 0
    %2317 = vmatpush1.bf16.msra.mxu0 0
    %2318 = vmatprep.mubr.bf16.mxu0 0
    %2319 = vmatmul.mubr.bf16.gmra.mrb[0].mxu0 %v1736
    %v2320 = vpop.f32.mrb[0].mxu0
    %v2321 = vadd.f32 %v2280, %v2320
    %v2322 = vpop.f32.mrb[0].mxu0
    %v2323 = vadd.f32 %v2282, %v2322
    %v2324 = vpop.f32.mrb[0].mxu0
    %v2325 = vpop.f32.mrb[0].mxu0
    %2326 = vdwg.mxu0
    %2327 = vmatprep.subr.bf16.mxu0 0
    %2328 = vmatpush1.bf16.msra.mxu0 %v2103
    %2329 = vmatprep.subr.bf16.mxu0 0
    %2330 = vmatpush1.bf16.msra.mxu0 %v2106
    %2331 = vmatprep.subr.bf16.mxu0 0
    %2332 = vmatpush1.bf16.msra.mxu0 %v2109
    %2333 = vmatprep.subr.bf16.mxu0 0
    %2334 = vmatpush1.bf16.msra.mxu0 %v2112
    %2335 = vmatprep.subr.bf16.mxu0 0
    %2336 = vmatpush1.bf16.msra.mxu0 %v2115
    %2337 = vmatprep.subr.bf16.mxu0 0
    %2338 = vmatpush1.bf16.msra.mxu0 %v2118
    %2339 = vmatprep.subr.bf16.mxu0 0
    %2340 = vmatpush1.bf16.msra.mxu0 %v2121
    %2341 = vmatprep.subr.bf16.mxu0 0
    %2342 = vmatpush1.bf16.msra.mxu0 %v2124
    %2343 = vmatprep.subr.bf16.mxu0 0
    %2344 = vmatpush1.bf16.msra.mxu0 %v2127
    %2345 = vmatprep.subr.bf16.mxu0 0
    %2346 = vmatpush1.bf16.msra.mxu0 %v2130
    %2347 = vmatprep.subr.bf16.mxu0 0
    %2348 = vmatpush1.bf16.msra.mxu0 %v2133
    %2349 = vmatprep.subr.bf16.mxu0 0
    %2350 = vmatpush1.bf16.msra.mxu0 %v2136
    %2351 = vmatprep.subr.bf16.mxu0 0
    %2352 = vmatpush1.bf16.msra.mxu0 %v2139
    %2353 = vmatprep.subr.bf16.mxu0 0
    %2354 = vmatpush1.bf16.msra.mxu0 %v2142
    %2355 = vmatprep.subr.bf16.mxu0 0
    %2356 = vmatpush1.bf16.msra.mxu0 %v2145
    %2357 = vmatprep.subr.bf16.mxu0 0
    %2358 = vmatpush1.bf16.msra.mxu0 %v2148
    %2359 = vmatprep.mubr.bf16.mxu0 %v1735
    %2360 = vmatmul.mubr.bf16.gmra.mrb[0].mxu0 %v1734
    %v2361 = vpop.f32.mrb[0].mxu0
    %v2362 = vadd.f32 %v1860, %v2361
    %v2363 = vpop.f32.mrb[0].mxu0
    %v2364 = vpop.f32.mrb[0].mxu0
    %v2365 = vpop.f32.mrb[0].mxu0
    %2366 = vdwg.mxu0
    %2367 = vmatprep.subr.bf16.mxu0 0
    %2368 = vmatpush1.bf16.msra.mxu0 %v2151
    %2369 = vmatprep.subr.bf16.mxu0 0
    %2370 = vmatpush1.bf16.msra.mxu0 %v2154
    %2371 = vmatprep.subr.bf16.mxu0 0
    %2372 = vmatpush1.bf16.msra.mxu0 %v2157
    %2373 = vmatprep.subr.bf16.mxu0 0
    %2374 = vmatpush1.bf16.msra.mxu0 %v2160
    %2375 = vmatprep.subr.bf16.mxu0 0
    %2376 = vmatpush1.bf16.msra.mxu0 %v2163
    %2377 = vmatprep.subr.bf16.mxu0 0
    %2378 = vmatpush1.bf16.msra.mxu0 %v2166
    %2379 = vmatprep.subr.bf16.mxu0 0
    %2380 = vmatpush1.bf16.msra.mxu0 %v2169
    %2381 = vmatprep.subr.bf16.mxu0 0
    %2382 = vmatpush1.bf16.msra.mxu0 %v2172
    %2383 = vmatprep.subr.bf16.mxu0 0
    %2384 = vmatpush1.bf16.msra.mxu0 0
    %2385 = vmatprep.subr.bf16.mxu0 0
    %2386 = vmatpush1.bf16.msra.mxu0 0
    %2387 = vmatprep.subr.bf16.mxu0 0
    %2388 = vmatpush1.bf16.msra.mxu0 0
    %2389 = vmatprep.subr.bf16.mxu0 0
    %2390 = vmatpush1.bf16.msra.mxu0 0
    %2391 = vmatprep.subr.bf16.mxu0 0
    %2392 = vmatpush1.bf16.msra.mxu0 0
    %2393 = vmatprep.subr.bf16.mxu0 0
    %2394 = vmatpush1.bf16.msra.mxu0 0
    %2395 = vmatprep.subr.bf16.mxu0 0
    %2396 = vmatpush1.bf16.msra.mxu0 0
    %2397 = vmatprep.subr.bf16.mxu0 0
    %2398 = vmatpush1.bf16.msra.mxu0 0
    %2399 = vmatprep.mubr.bf16.mxu0 0
    %2400 = vmatmul.mubr.bf16.gmra.mrb[0].mxu0 %v1736
    %v2401 = vpop.f32.mrb[0].mxu0
    %v2402 = vadd.f32 %v2362, %v2401
    %v2403 = vpop.f32.mrb[0].mxu0
    %v2404 = vpop.f32.mrb[0].mxu0
    %v2405 = vpop.f32.mrb[0].mxu0
    %2406 = vdwg.mxu0
    %v2407 = vmax.f32 %v2321, 0.0
    %v2408 = vmax.f32 %v2323, 0.0
    %v2409 = vmax.f32 %v2402, 0.0
    %v2410 = vpack.c.bf16 %v2407, %v2407
    %v2411 = vpack.c.bf16 %v2408, %v2408
    %v2412 = vpack.c.bf16 %v2409, %v2409
    %s2413 = scalar_lea.vmem %s8, 192
    %v2414 = vld [vmem:[%s2413] sm:$0xf]
    %v2415 = vld [vmem:[%s2413 + $0x4] sm:$0xf]
    %v2416 = vld [vmem:[%s2413 + $0x8] sm:$0xf]
    %v2417 = vld [vmem:[%s2413 + $0xc] sm:$0xf]
    %v2418 = vld [vmem:[%s2413 + $0x10] sm:$0xf]
    %v2419 = vld [vmem:[%s2413 + $0x14] sm:$0xf]
    %v2420 = vld [vmem:[%s2413 + $0x18] sm:$0xf]
    %v2421 = vld [vmem:[%s2413 + $0x1c] sm:$0xf]
    %v2422 = vld [vmem:[%s2413 + $0x20] sm:$0xf]
    %v2423 = vld [vmem:[%s2413 + $0x24] sm:$0xf]
    %v2424 = vld [vmem:[%s2413 + $0x28] sm:$0xf]
    %v2425 = vld [vmem:[%s2413 + $0x2c] sm:$0xf]
    %v2426 = vld [vmem:[%s2413 + $0x30] sm:$0xf]
    %v2427 = vld [vmem:[%s2413 + $0x34] sm:$0xf]
    %v2428 = vld [vmem:[%s2413 + $0x38] sm:$0xf]
    %v2429 = vld [vmem:[%s2413 + $0x3c] sm:$0xf]
    %v2430 = vld [vmem:[%s2413 + $0x40] sm:$0xf]
    %v2431 = vld [vmem:[%s2413 + $0x44] sm:$0xf]
    %v2432 = vld [vmem:[%s2413 + $0x48] sm:$0xf]
    %v2433 = vld [vmem:[%s2413 + $0x4c] sm:$0xf]
    %v2434 = vld [vmem:[%s2413 + $0x50] sm:$0xf]
    %v2435 = vld [vmem:[%s2413 + $0x54] sm:$0xf]
    %v2436 = vld [vmem:[%s2413 + $0x58] sm:$0xf]
    %v2437 = vld [vmem:[%s2413 + $0x5c] sm:$0xf]
    %v2438 = vld [vmem:[%s2413 + $0x60] sm:$0xf]
    %v2439 = vld [vmem:[%s2413 + $0x64] sm:$0xf]
    %v2440 = vld [vmem:[%s2413 + $0x68] sm:$0xf]
    %v2441 = vld [vmem:[%s2413 + $0x6c] sm:$0xf]
    %v2442 = vld [vmem:[%s2413 + $0x70] sm:$0xf]
    %v2443 = vld [vmem:[%s2413 + $0x74] sm:$0xf]
    %v2444 = vld [vmem:[%s2413 + $0x78] sm:$0xf]
    %v2445 = vld [vmem:[%s2413 + $0x7c] sm:$0xf]
    %v2446 = vld [vmem:[%s2413 + $0x80] sm:$0xf]
    %v2447 = vld [vmem:[%s2413 + $0x84] sm:$0xf]
    %v2448 = vld [vmem:[%s2413 + $0x88] sm:$0xf]
    %v2449 = vld [vmem:[%s2413 + $0x8c] sm:$0xf]
    %v2450 = vld [vmem:[%s2413 + $0x90] sm:$0xf]
    %v2451 = vld [vmem:[%s2413 + $0x94] sm:$0xf]
    %v2452 = vld [vmem:[%s2413 + $0x98] sm:$0xf]
    %v2453 = vld [vmem:[%s2413 + $0x9c] sm:$0xf]
    %v2454 = vld [vmem:[%s2413 + $0xa0] sm:$0xf]
    %v2455 = vld [vmem:[%s2413 + $0xa4] sm:$0xf]
    %v2456 = vld [vmem:[%s2413 + $0xa8] sm:$0xf]
    %v2457 = vld [vmem:[%s2413 + $0xac] sm:$0xf]
    %v2458 = vld [vmem:[%s2413 + $0xb0] sm:$0xf]
    %v2459 = vld [vmem:[%s2413 + $0xb4] sm:$0xf]
    %v2460 = vld [vmem:[%s2413 + $0xb8] sm:$0xf]
    %v2461 = vld [vmem:[%s2413 + $0xbc] sm:$0xf]
    %s2462 = sadd.s32 %s69, 1
    %s2463 = sld [smem:[#allocation5 + %s2462]]
    %v2464 = vstv %s2463
    %v2513 = vunpack.c.l.b16 %v2414
    %v2514 = vunpack.c.l.b16 %v2415
    %v2515 = vunpack.c.l.b16 %v2416
    %v2516 = vunpack.c.l.b16 %v2417
    %v2517 = vunpack.c.l.b16 %v2418
    %v2518 = vunpack.c.l.b16 %v2419
    %v2519 = vunpack.c.l.b16 %v2420
    %v2520 = vunpack.c.l.b16 %v2421
    %v2521 = vunpack.c.l.b16 %v2422
    %v2522 = vunpack.c.l.b16 %v2423
    %v2523 = vunpack.c.l.b16 %v2424
    %v2524 = vunpack.c.l.b16 %v2425
    %v2525 = vunpack.c.l.b16 %v2426
    %v2526 = vunpack.c.l.b16 %v2427
    %v2527 = vunpack.c.l.b16 %v2428
    %v2528 = vunpack.c.l.b16 %v2429
    %v2529 = vunpack.c.l.b16 %v2430
    %v2530 = vunpack.c.l.b16 %v2431
    %v2531 = vunpack.c.l.b16 %v2432
    %v2532 = vunpack.c.l.b16 %v2433
    %v2533 = vunpack.c.l.b16 %v2434
    %v2534 = vunpack.c.l.b16 %v2435
    %v2535 = vunpack.c.l.b16 %v2436
    %v2536 = vunpack.c.l.b16 %v2437
    %v2537 = vunpack.c.l.b16 %v2438
    %v2538 = vunpack.c.l.b16 %v2439
    %v2539 = vunpack.c.l.b16 %v2440
    %v2540 = vunpack.c.l.b16 %v2441
    %v2541 = vunpack.c.l.b16 %v2442
    %v2542 = vunpack.c.l.b16 %v2443
    %v2543 = vunpack.c.l.b16 %v2444
    %v2544 = vunpack.c.l.b16 %v2445
    %v2545 = vunpack.c.l.b16 %v2446
    %v2546 = vunpack.c.l.b16 %v2447
    %v2547 = vunpack.c.l.b16 %v2448
    %v2548 = vunpack.c.l.b16 %v2449
    %v2549 = vunpack.c.l.b16 %v2450
    %v2550 = vunpack.c.l.b16 %v2451
    %v2551 = vunpack.c.l.b16 %v2452
    %v2552 = vunpack.c.l.b16 %v2453
    %v2553 = vunpack.c.l.b16 %v2454
    %v2554 = vunpack.c.l.b16 %v2455
    %v2555 = vunpack.c.l.b16 %v2456
    %v2556 = vunpack.c.l.b16 %v2457
    %v2557 = vunpack.c.l.b16 %v2458
    %v2558 = vunpack.c.l.b16 %v2459
    %v2559 = vunpack.c.l.b16 %v2460
    %v2560 = vunpack.c.l.b16 %v2461
    %v2561 = vpack.c.b16 %v2514, %v2513
    %v2562 = vpack.c.b16 %v2516, %v2515
    %v2563 = vpack.c.b16 %v2518, %v2517
    %v2564 = vpack.c.b16 %v2520, %v2519
    %v2565 = vpack.c.b16 %v2522, %v2521
    %v2566 = vpack.c.b16 %v2524, %v2523
    %v2567 = vpack.c.b16 %v2526, %v2525
    %v2568 = vpack.c.b16 %v2528, %v2527
    %v2569 = vpack.c.b16 %v2530, %v2529
    %v2570 = vpack.c.b16 %v2532, %v2531
    %v2571 = vpack.c.b16 %v2534, %v2533
    %v2572 = vpack.c.b16 %v2536, %v2535
    %v2573 = vpack.c.b16 %v2538, %v2537
    %v2574 = vpack.c.b16 %v2540, %v2539
    %v2575 = vpack.c.b16 %v2542, %v2541
    %v2576 = vpack.c.b16 %v2544, %v2543
    %v2577 = vpack.c.b16 %v2546, %v2545
    %v2578 = vpack.c.b16 %v2548, %v2547
    %v2579 = vpack.c.b16 %v2550, %v2549
    %v2580 = vpack.c.b16 %v2552, %v2551
    %v2581 = vpack.c.b16 %v2554, %v2553
    %v2582 = vpack.c.b16 %v2556, %v2555
    %v2583 = vpack.c.b16 %v2558, %v2557
    %v2584 = vpack.c.b16 %v2560, %v2559
    %2609 = vmatprep.subr.bf16.mxu0 0
    %2610 = vmatpush1.bf16.msra.mxu0 %v2561
    %2611 = vmatprep.subr.bf16.mxu0 0
    %2612 = vmatpush1.bf16.msra.mxu0 %v2562
    %2613 = vmatprep.subr.bf16.mxu0 0
    %2614 = vmatpush1.bf16.msra.mxu0 %v2563
    %2615 = vmatprep.subr.bf16.mxu0 0
    %2616 = vmatpush1.bf16.msra.mxu0 %v2564
    %2617 = vmatprep.subr.bf16.mxu0 0
    %2618 = vmatpush1.bf16.msra.mxu0 %v2565
    %2619 = vmatprep.subr.bf16.mxu0 0
    %2620 = vmatpush1.bf16.msra.mxu0 %v2566
    %2621 = vmatprep.subr.bf16.mxu0 0
    %2622 = vmatpush1.bf16.msra.mxu0 %v2567
    %2623 = vmatprep.subr.bf16.mxu0 0
    %2624 = vmatpush1.bf16.msra.mxu0 %v2568
    %2625 = vmatprep.subr.bf16.mxu0 0
    %2626 = vmatpush1.bf16.msra.mxu0 %v2569
    %2627 = vmatprep.subr.bf16.mxu0 0
    %2628 = vmatpush1.bf16.msra.mxu0 %v2570
    %2629 = vmatprep.subr.bf16.mxu0 0
    %2630 = vmatpush1.bf16.msra.mxu0 %v2571
    %2631 = vmatprep.subr.bf16.mxu0 0
    %2632 = vmatpush1.bf16.msra.mxu0 %v2572
    %2633 = vmatprep.subr.bf16.mxu0 0
    %2634 = vmatpush1.bf16.msra.mxu0 %v2573
    %2635 = vmatprep.subr.bf16.mxu0 0
    %2636 = vmatpush1.bf16.msra.mxu0 %v2574
    %2637 = vmatprep.subr.bf16.mxu0 0
    %2638 = vmatpush1.bf16.msra.mxu0 %v2575
    %2639 = vmatprep.subr.bf16.mxu0 0
    %2640 = vmatpush1.bf16.msra.mxu0 %v2576
    %2641 = vmatprep.mubr.bf16.mxu0 %v2411
    %2642 = vmatmul.mubr.bf16.gmra.mrb[0].mxu0 %v2410
    %v2643 = vpop.f32.mrb[0].mxu0
    %v2644 = vadd.f32 %v2464, %v2643
    %v2645 = vpop.f32.mrb[0].mxu0
    %v2646 = vpop.f32.mrb[0].mxu0
    %v2647 = vpop.f32.mrb[0].mxu0
    %2648 = vdwg.mxu0
    %2649 = vmatprep.subr.bf16.mxu0 0
    %2650 = vmatpush1.bf16.msra.mxu0 %v2577
    %2651 = vmatprep.subr.bf16.mxu0 0
    %2652 = vmatpush1.bf16.msra.mxu0 %v2578
    %2653 = vmatprep.subr.bf16.mxu0 0
    %2654 = vmatpush1.bf16.msra.mxu0 %v2579
    %2655 = vmatprep.subr.bf16.mxu0 0
    %2656 = vmatpush1.bf16.msra.mxu0 %v2580
    %2657 = vmatprep.subr.bf16.mxu0 0
    %2658 = vmatpush1.bf16.msra.mxu0 %v2581
    %2659 = vmatprep.subr.bf16.mxu0 0
    %2660 = vmatpush1.bf16.msra.mxu0 %v2582
    %2661 = vmatprep.subr.bf16.mxu0 0
    %2662 = vmatpush1.bf16.msra.mxu0 %v2583
    %2663 = vmatprep.subr.bf16.mxu0 0
    %2664 = vmatpush1.bf16.msra.mxu0 %v2584
    %2665 = vmatprep.subr.bf16.mxu0 0
    %2666 = vmatpush1.bf16.msra.mxu0 0
    %2667 = vmatprep.subr.bf16.mxu0 0
    %2668 = vmatpush1.bf16.msra.mxu0 0
    %2669 = vmatprep.subr.bf16.mxu0 0
    %2670 = vmatpush1.bf16.msra.mxu0 0
    %2671 = vmatprep.subr.bf16.mxu0 0
    %2672 = vmatpush1.bf16.msra.mxu0 0
    %2673 = vmatprep.subr.bf16.mxu0 0
    %2674 = vmatpush1.bf16.msra.mxu0 0
    %2675 = vmatprep.subr.bf16.mxu0 0
    %2676 = vmatpush1.bf16.msra.mxu0 0
    %2677 = vmatprep.subr.bf16.mxu0 0
    %2678 = vmatpush1.bf16.msra.mxu0 0
    %2679 = vmatprep.subr.bf16.mxu0 0
    %2680 = vmatpush1.bf16.msra.mxu0 0
    %2681 = vmatprep.mubr.bf16.mxu0 0
    %2682 = vmatmul.mubr.bf16.gmra.mrb[0].mxu0 %v2412
    %v2683 = vpop.f32.mrb[0].mxu0
    %v2684 = vadd.f32 %v2644, %v2683
    %v2685 = vpop.f32.mrb[0].mxu0
    %v2686 = vpop.f32.mrb[0].mxu0
    %v2687 = vpop.f32.mrb[0].mxu0
    %2688 = vdwg.mxu0
    %s2689 = scalar_lea.vmem %s10, 8
    %2690 = vst.msk [vmem:[%s2689] sm:$0xff] %vm1383, %v2684
    // Predicated region
    $region50: #{manager_critic_forward.1} parent=1 // pred_check
      _
    $region51: #{manager_critic_forward.1} parent=1 // pred_check_branch
      %2692 = sbr.rel (0) target = $region53
    $region52: #{manager_critic_forward.1} parent=1 // pred_region
      _
    $region53: #{manager_critic_forward.1} parent=1 // pred_fallthru
      _
    // Predicated region
    $region54: #{manager_critic_forward.1} parent=1 // pred_check
      _
    $region55: #{manager_critic_forward.1} parent=1 // pred_check_branch
      %2694 = sbr.rel (0) target = $region57
    $region56: #{manager_critic_forward.1} parent=1 // pred_region
      _
    $region57: #{manager_critic_forward.1} parent=1 // pred_fallthru
      _
    %2695 = vsyncpa [#allocation3], 1
    %2696 = vsyncpa [#allocation4], 1

</llo_original>
